<compile_context>
chip_gen: v6e
topology: v6e:2x2x1
jax: 0.10.0
libtpu: 0.0.40
codegen_flags: <defaults>
</compile_context>

<pallas_src>
import functools

import jax
import jax.numpy as jnp
import numpy as np
from jax.experimental import pallas as pl
from jax.experimental.pallas import tpu as pltpu

_VMEM_LIMIT = 32 * 1024 * 1024  # safe scoped-VMEM budget on v5e/v6e/v7x


def _round_up(x, m):
    return (x + m - 1) // m * m


# ---------------------------------------------------------------------------
# Kernel 1: SpectralConv per-mode complex channel contraction, on the MXU.
#   x2[m, b, :]  = [Re(x)[m,b,:], Im(x)[m,b,:]]                (M, B, 2Cin)
#   w2[m, :, :]  = [[wr, wi], [-wi, wr]]                       (M, 2Cin, 2Cout)
#   out[m, b, :] = x2[m, b, :] @ w2[m]  = [Re(out), Im(out)]   (M, B, 2Cout)
# One mode-batched matmul per grid step (modes tiled on the grid, "parallel").
# ---------------------------------------------------------------------------
def _spectral_mul_kernel(x_ref, w_ref, o_ref):
    o_ref[...] = jax.lax.dot_general(
        x_ref[...], w_ref[...],
        dimension_numbers=(((2,), (1,)), ((0,), (0,))),   # batched matmul over modes
        preferred_element_type=jnp.float32,
    )


def spectral_mul(x2, w2, *, mode_tile=128, vmem_limit_bytes=_VMEM_LIMIT):
    M, B, c2i = x2.shape
    c2o = w2.shape[-1]
    mt = min(mode_tile, M)
    Mp = _round_up(M, mt)
    if Mp != M:  # zero-pad the mode axis; padded modes produce zeros, sliced off below
        x2 = jnp.pad(x2, ((0, Mp - M), (0, 0), (0, 0)))
        w2 = jnp.pad(w2, ((0, Mp - M), (0, 0), (0, 0)))

    bytes_accessed = (x2.size * x2.dtype.itemsize
                      + w2.size * w2.dtype.itemsize
                      + Mp * B * c2o * 4)
    out = pl.pallas_call(
        _spectral_mul_kernel,
        out_shape=jax.ShapeDtypeStruct((Mp, B, c2o), jnp.float32),
        grid_spec=pltpu.PrefetchScalarGridSpec(
            num_scalar_prefetch=0,
            grid=(Mp // mt,),
            in_specs=[
                pl.BlockSpec((mt, B, c2i), lambda i: (i, 0, 0)),
                pl.BlockSpec((mt, c2i, c2o), lambda i: (i, 0, 0)),
            ],
            out_specs=pl.BlockSpec((mt, B, c2o), lambda i: (i, 0, 0)),
        ),
        compiler_params=pltpu.CompilerParams(
            dimension_semantics=("parallel",),
            vmem_limit_bytes=vmem_limit_bytes,
        ),
        cost_estimate=pl.CostEstimate(
            flops=int(2 * Mp * B * c2i * c2o),
            transcendentals=0,
            bytes_accessed=int(bytes_accessed),
        ),
    )(x2, w2)
    return out[:M]


# ---------------------------------------------------------------------------
# Kernel 2: fused 1x1-conv skip + residual add (+ GELU), channels-first.
#   out[b, :, n] = gelu( fno[b, :, n] + W @ x[b, :, n] + bias )
# Spatial (B, H*W flattened) tiled on the grid; spatial dim sits on lanes so
# loads/stores are lane-dense even for small channel counts.
# ---------------------------------------------------------------------------
def _skip_fuse_kernel(x_ref, fno_ref, w_ref, b_ref, o_ref, *, apply_gelu):
    # (Cout, Cin) @ (Cin, Nt) -> (Cout, Nt) on the MXU, f32 accumulation.
    skip = jnp.dot(w_ref[...], x_ref[0], preferred_element_type=jnp.float32)
    y = fno_ref[0].astype(jnp.float32) + skip + b_ref[...].astype(jnp.float32)
    if apply_gelu:
        y = jax.nn.gelu(y, approximate=False)   # exact erf-GELU == torch default
    o_ref[0] = y.astype(o_ref.dtype)


def skip_fuse(x_bcn, fno_bcn, w_oc, b_col, apply_gelu, *,
              spatial_tile=2048, vmem_limit_bytes=_VMEM_LIMIT):
    B, Cin, N = x_bcn.shape
    Cout = fno_bcn.shape[1]
    nt = min(spatial_tile, _round_up(N, 128))     # lane-dense tile, multiple of 128
    Np = _round_up(N, nt)
    if Np != N:                                    # pad tail instead of asserting
        x_bcn = jnp.pad(x_bcn, ((0, 0), (0, 0), (0, Np - N)))
        fno_bcn = jnp.pad(fno_bcn, ((0, 0), (0, 0), (0, Np - N)))

    kern = functools.partial(_skip_fuse_kernel, apply_gelu=apply_gelu)
    bytes_accessed = (x_bcn.size * x_bcn.dtype.itemsize
                      + fno_bcn.size * fno_bcn.dtype.itemsize
                      + w_oc.size * w_oc.dtype.itemsize
                      + b_col.size * b_col.dtype.itemsize
                      + B * Cout * Np * 4)
    out = pl.pallas_call(
        kern,
        out_shape=jax.ShapeDtypeStruct((B, Cout, Np), jnp.float32),
        grid_spec=pltpu.PrefetchScalarGridSpec(
            num_scalar_prefetch=0,
            grid=(B, Np // nt),
            in_specs=[
                pl.BlockSpec((1, Cin, nt), lambda b, j: (b, 0, j)),
                pl.BlockSpec((1, Cout, nt), lambda b, j: (b, 0, j)),
                pl.BlockSpec((Cout, Cin), lambda b, j: (0, 0)),
                pl.BlockSpec((Cout, 1), lambda b, j: (0, 0)),
            ],
            out_specs=pl.BlockSpec((1, Cout, nt), lambda b, j: (b, 0, j)),
        ),
        compiler_params=pltpu.CompilerParams(
            dimension_semantics=("parallel", "parallel"),
            vmem_limit_bytes=vmem_limit_bytes,
        ),
        cost_estimate=pl.CostEstimate(
            flops=int(2 * B * Np * Cin * Cout + 2 * B * Np * Cout),
            transcendentals=int(B * Np * Cout) if apply_gelu else 0,
            bytes_accessed=int(bytes_accessed),
        ),
    )(x_bcn, fno_bcn, w_oc, b_col)
    return out[:, :, :N]


# ---------------------------------------------------------------------------
# FNO block forward (forward_with_postactivation, geo_feature=None, chi=None)
# ---------------------------------------------------------------------------
def fno_block_forward(x, params, n_modes, n_layers, index=0,
                      compute_dtype=jnp.bfloat16):
    B, Cin, H, W = x.shape
    m1, m2 = n_modes
    Cout = params["skip_w"].shape[0]
    Wf = W // 2 + 1
    if 2 * m1 > H:
        raise ValueError("2 * n_modes[0] must be <= H (mode corner slices would overlap).")

    # --- SpectralConv: rFFT2 in plain JAX (no Pallas FFT primitive). ------
    x_ft = jnp.fft.rfft2(x, norm="forward")            # (B, Cin, H, Wf) complex64

    # Gather the two retained mode corners into a modes-leading layout.
    top = x_ft[:, :, :m1, :m2]
    bot = x_ft[:, :, H - m1:, :m2]
    xm = jnp.stack([top, bot], axis=0)                  # (2, B, Cin, m1, m2)
    xm = jnp.moveaxis(xm, (3, 4), (1, 2))               # (2, m1, m2, B, Cin)
    xm = xm.reshape(2 * m1 * m2, B, Cin)                # (M, B, Cin)
    x2 = jnp.concatenate([jnp.real(xm), jnp.imag(xm)], axis=-1)   # (M, B, 2Cin)
    x2 = x2.astype(compute_dtype)

    def mode_first(w):                                   # (Cin,Cout,m1,m2) -> (m1*m2,Cin,Cout)
        return jnp.moveaxis(w, (2, 3), (0, 1)).reshape(m1 * m2, Cin, Cout)

    wr = jnp.concatenate([mode_first(params["w1r"]), mode_first(params["w2r"])], axis=0)
    wi = jnp.concatenate([mode_first(params["w1i"]), mode_first(params["w2i"])], axis=0)
    # Real 2Cin x 2Cout block matrix implementing the complex multiply on the MXU.
    w2 = jnp.concatenate(
        [jnp.concatenate([wr, wi], axis=-1),
         jnp.concatenate([-wi, wr], axis=-1)], axis=1).astype(compute_dtype)  # (M,2Cin,2Cout)

    out2 = spectral_mul(x2, w2)                          # (M, B, 2Cout) f32
    out_c = (out2[..., :Cout] + 1j * out2[..., Cout:]).astype(jnp.complex64)  # (M, B, Cout)
    out_c = out_c.reshape(2, m1, m2, B, Cout)
    out_c = jnp.moveaxis(out_c, (1, 2), (3, 4))          # (2, B, Cout, m1, m2)

    out_ft = jnp.zeros((B, Cout, H, Wf), jnp.complex64)
    out_ft = out_ft.at[:, :, :m1, :m2].set(out_c[0])
    out_ft = out_ft.at[:, :, H - m1:, :m2].set(out_c[1])
    x_fno = jnp.fft.irfft2(out_ft, s=(H, W), norm="forward")   # (B, Cout, H, W) f32

    # convs.transform() is identity here (no output scaling / output_shape).
    # --- fno_skip (1x1 conv) + residual + GELU, fused in Pallas -----------
    # Channels-first, spatial flattened on lanes: no NCHW<->NHWC transposes.
    HW = H * W
    x_flat = x.reshape(B, Cin, HW).astype(compute_dtype)
    fno_flat = x_fno.reshape(B, Cout, HW).astype(compute_dtype)
    w_oc = params["skip_w"].astype(compute_dtype)               # (Cout, Cin)
    b_col = params["skip_b"].reshape(Cout, 1).astype(jnp.float32)
    apply_gelu = index < n_layers - 1
    out_flat = skip_fuse(x_flat, fno_flat, w_oc, b_col, apply_gelu)
    return out_flat.reshape(B, Cout, H, W)


# ---------------------------------------------------------------------------
# Pure-JAX reference (same math, no Pallas) for the correctness check.
# ---------------------------------------------------------------------------
def fno_block_reference(x, params, n_modes, n_layers, index=0):
    B, Cin, H, W = x.shape
    m1, m2 = n_modes
    Cout = params["skip_w"].shape[0]
    Wf = W // 2 + 1
    x_ft = jnp.fft.rfft2(x, norm="forward")
    w1 = params["w1r"] + 1j * params["w1i"]
    w2 = params["w2r"] + 1j * params["w2i"]
    out_ft = jnp.zeros((B, Cout, H, Wf), jnp.complex64)
    out_ft = out_ft.at[:, :, :m1, :m2].set(
        jnp.einsum("bixy,ioxy->boxy", x_ft[:, :, :m1, :m2], w1))
    out_ft = out_ft.at[:, :, H - m1:, :m2].set(
        jnp.einsum("bixy,ioxy->boxy", x_ft[:, :, H - m1:, :m2], w2))
    x_fno = jnp.fft.irfft2(out_ft, s=(H, W), norm="forward")
    skip = jnp.einsum("oi,bihw->bohw", params["skip_w"], x) \
        + params["skip_b"][None, :, None, None]
    y = x_fno + skip
    if index < n_layers - 1:
        y = jax.nn.gelu(y, approximate=False)
    return y


if __name__ == "__main__":
    # Small, deterministic problem consistent with the module:
    B, Cin, Cout, H, W = 2, 4, 4, 16, 16
    n_modes = (4, 4)          # modes kept per spatial dim (last dim already halved)
    n_layers = 2              # index=0 < n_layers-1 -> GELU is applied
    index = 0

    key = jax.random.PRNGKey(0)
    k = jax.random.split(key, 8)
    scale = 1.0 / (Cin * Cout)
    params = {
        "w1r": scale * jax.random.normal(k[0], (Cin, Cout, *n_modes), jnp.float32),
        "w1i": scale * jax.random.normal(k[1], (Cin, Cout, *n_modes), jnp.float32),
        "w2r": scale * jax.random.normal(k[2], (Cin, Cout, *n_modes), jnp.float32),
        "w2i": scale * jax.random.normal(k[3], (Cin, Cout, *n_modes), jnp.float32),
        # 1x1 conv skip: PyTorch Conv2d weight (Cout, Cin, 1, 1) squeezed -> (Cout, Cin)
        "skip_w": (1.0 / Cin) ** 0.5
        * jax.random.normal(k[4], (Cout, Cin), jnp.float32),
        "skip_b": 0.01 * jax.random.normal(k[5], (Cout,), jnp.float32),
    }
    x = jax.random.normal(k[6], (B, Cin, H, W), jnp.float32)

    ref = jax.block_until_ready(
        fno_block_reference(x, params, n_modes, n_layers, index))

    # f32 path: strict semantic check against the pure-JAX reference.
    out_f32 = jax.block_until_ready(
        fno_block_forward(x, params, n_modes, n_layers, index,
                          compute_dtype=jnp.float32))
    np.testing.assert_allclose(np.asarray(out_f32), np.asarray(ref),
                               rtol=5e-4, atol=5e-4)

    # bf16 path (default; halves HBM/VMEM traffic): smoke-level consistency check.
    out_bf16 = jax.block_until_ready(
        fno_block_forward(x, params, n_modes, n_layers, index,
                          compute_dtype=jnp.bfloat16))
    np.testing.assert_allclose(np.asarray(out_bf16), np.asarray(ref),
                               rtol=1e-1, atol=1e-1)

    # TODO(synk): geo_feature / geo_embedding / chi branches and
    # output_scaling_factor resampling are not exercised in the default
    # forward path and are left unimplemented.
    print("KERNEL_OK")
</pallas_src>

<mosaic_0001>
module attributes {stable_mosaic.version = 11 : i64} {
  func.func @_spectral_mul_kernel(%arg0: i32, %arg1: memref<32x2x8xf32, #tpu.memory_space<vmem>>, %arg2: memref<32x8x8xf32, #tpu.memory_space<vmem>>, %arg3: memref<32x2x8xf32, #tpu.memory_space<vmem>>) attributes {dimension_semantics = [#tpu.dimension_semantics<parallel>], iteration_bounds = array<i64: 1>, scalar_prefetch = 0 : i64, scratch_operands = 0 : i64, tpu.core_type = #tpu.core_type<tc>, window_params = [{transform_indices = @transform_0, window_bounds = array<i64: 32, 2, 8>}, {transform_indices = @transform_1, window_bounds = array<i64: 32, 8, 8>}, {transform_indices = @transform_2, window_bounds = array<i64: 32, 2, 8>}]} {
    %c0 = arith.constant 0 : index
    %c0_0 = arith.constant 0 : index
    %c0_1 = arith.constant 0 : index
    %0 = vector.load %arg1[%c0, %c0_0, %c0_1] : memref<32x2x8xf32, #tpu.memory_space<vmem>>, vector<32x2x8xf32>
    %c0_2 = arith.constant 0 : index
    %c0_3 = arith.constant 0 : index
    %c0_4 = arith.constant 0 : index
    %1 = vector.load %arg2[%c0_2, %c0_3, %c0_4] : memref<32x8x8xf32, #tpu.memory_space<vmem>>, vector<32x8x8xf32>
    %cst = arith.constant dense<0.000000e+00> : vector<32x2x8xf32>
    %2 = tpu.matmul %0, %1, %cst {dimension_numbers = #tpu.dot_dimension_numbers<[2], [1], [1], [2], [0, 0, 0, 1, 1, 2], [0], [0]>} : vector<32x2x8xf32>, vector<32x8x8xf32>, vector<32x2x8xf32> -> vector<32x2x8xf32>
    %c0_5 = arith.constant 0 : index
    %c0_6 = arith.constant 0 : index
    %c0_7 = arith.constant 0 : index
    %3 = vector.load %arg3[%c0_5, %c0_6, %c0_7] : memref<32x2x8xf32, #tpu.memory_space<vmem>>, vector<32x2x8xf32>
    tpu.vector_store %arg3[%c0_5, %c0_6, %c0_7], %2 {strides = array<i32>} : memref<32x2x8xf32, #tpu.memory_space<vmem>>, vector<32x2x8xf32>,
    return
  }
  func.func @transform_0(%arg0: i32) -> (i32, i32, i32) {
    %c0_i32 = arith.constant 0 : i32
    %c0_i32_0 = arith.constant 0 : i32
    %c0_i32_1 = arith.constant 0 : i32
    return %arg0, %c0_i32, %c0_i32_0 : i32, i32, i32
  }
  func.func @transform_1(%arg0: i32) -> (i32, i32, i32) {
    %c0_i32 = arith.constant 0 : i32
    %c0_i32_0 = arith.constant 0 : i32
    %c0_i32_1 = arith.constant 0 : i32
    return %arg0, %c0_i32, %c0_i32_0 : i32, i32, i32
  }
  func.func @transform_2(%arg0: i32) -> (i32, i32, i32) {
    %c0_i32 = arith.constant 0 : i32
    %c0_i32_0 = arith.constant 0 : i32
    %c0_i32_1 = arith.constant 0 : i32
    return %arg0, %c0_i32, %c0_i32_0 : i32, i32, i32
  }
}

</mosaic_0001>

<llo_original>
// kernel: tpu_custom_call.1
$region0: #{tpu_custom_call.1}
  #allocation0 [shape = 'u32[]', space=smem, size = 0x4, offset = 0x4, fixed_abs, tag = 'smem constant byte address 0x4 - core index']
  #allocation1 [shape = 'u32[144,128]{1,0:T(1,128)}', space=vmem, size = 0x12000, scoped, tag = 'internal scratch']
  %s0 = inlined_call_operand.vmem [shape: f32[32,2,8], index: 0, kind: input, shape index: {}]
  %s1 = inlined_call_operand.vmem [shape: f32[32,8,8], index: 1, kind: input, shape index: {}]
  %s2 = inlined_call_operand.vmem [shape: f32[32,2,8], index: 2, kind: output, shape index: {}]
  %s3 = sld [smem:[#allocation0]]
  $region18: #{tpu_custom_call.1} parent=0
    _
  %s5 = ssub.s32 1, %s3
  %s6 = scalar_select 0, %s5, %s3
  // Predicated region
  $region2: #{tpu_custom_call.1} parent=0 // pred_check
    _
  $region3: #{tpu_custom_call.1} parent=0 // pred_check_branch
    %8 = sbr.rel (0) target = $region5
  $region4: #{tpu_custom_call.1} parent=0 // pred_region
    _
  $region5: #{tpu_custom_call.1} parent=0 // pred_fallthru
    _
  // Predicated region
  $region6: #{tpu_custom_call.1} parent=0 // pred_check
    _
  $region7: #{tpu_custom_call.1} parent=0 // pred_check_branch
    %10 = sbr.rel (0) target = $region9
  $region8: #{tpu_custom_call.1} parent=0 // pred_region
    _
  $region9: #{tpu_custom_call.1} parent=0 // pred_fallthru
    _
  %v11 = vld [vmem:[%s0] sm:$0x3]
  %v12 = vld [vmem:[%s0 + $0x2] sm:$0x3]
  %v13 = vld [vmem:[%s0 + $0x4] sm:$0x3]
  %v14 = vld [vmem:[%s0 + $0x6] sm:$0x3]
  %v15 = vld [vmem:[%s0 + $0x8] sm:$0x3]
  %v16 = vld [vmem:[%s0 + $0xa] sm:$0x3]
  %v17 = vld [vmem:[%s0 + $0xc] sm:$0x3]
  %v18 = vld [vmem:[%s0 + $0xe] sm:$0x3]
  %v19 = vld [vmem:[%s0 + $0x10] sm:$0x3]
  %v20 = vld [vmem:[%s0 + $0x12] sm:$0x3]
  %v21 = vld [vmem:[%s0 + $0x14] sm:$0x3]
  %v22 = vld [vmem:[%s0 + $0x16] sm:$0x3]
  %v23 = vld [vmem:[%s0 + $0x18] sm:$0x3]
  %v24 = vld [vmem:[%s0 + $0x1a] sm:$0x3]
  %v25 = vld [vmem:[%s0 + $0x1c] sm:$0x3]
  %v26 = vld [vmem:[%s0 + $0x1e] sm:$0x3]
  %v27 = vld [vmem:[%s0 + $0x20] sm:$0x3]
  %v28 = vld [vmem:[%s0 + $0x22] sm:$0x3]
  %v29 = vld [vmem:[%s0 + $0x24] sm:$0x3]
  %v30 = vld [vmem:[%s0 + $0x26] sm:$0x3]
  %v31 = vld [vmem:[%s0 + $0x28] sm:$0x3]
  %v32 = vld [vmem:[%s0 + $0x2a] sm:$0x3]
  %v33 = vld [vmem:[%s0 + $0x2c] sm:$0x3]
  %v34 = vld [vmem:[%s0 + $0x2e] sm:$0x3]
  %v35 = vld [vmem:[%s0 + $0x30] sm:$0x3]
  %v36 = vld [vmem:[%s0 + $0x32] sm:$0x3]
  %v37 = vld [vmem:[%s0 + $0x34] sm:$0x3]
  %v38 = vld [vmem:[%s0 + $0x36] sm:$0x3]
  %v39 = vld [vmem:[%s0 + $0x38] sm:$0x3]
  %v40 = vld [vmem:[%s0 + $0x3a] sm:$0x3]
  %v41 = vld [vmem:[%s0 + $0x3c] sm:$0x3]
  %v42 = vld [vmem:[%s0 + $0x3e] sm:$0x3]
  %v43 = vld [vmem:[%s1] sm:$0xff]
  %v44 = vld [vmem:[%s1 + $0x8] sm:$0xff]
  %v45 = vld [vmem:[%s1 + $0x10] sm:$0xff]
  %v46 = vld [vmem:[%s1 + $0x18] sm:$0xff]
  %v47 = vld [vmem:[%s1 + $0x20] sm:$0xff]
  %v48 = vld [vmem:[%s1 + $0x28] sm:$0xff]
  %v49 = vld [vmem:[%s1 + $0x30] sm:$0xff]
  %v50 = vld [vmem:[%s1 + $0x38] sm:$0xff]
  %v51 = vld [vmem:[%s1 + $0x40] sm:$0xff]
  %v52 = vld [vmem:[%s1 + $0x48] sm:$0xff]
  %v53 = vld [vmem:[%s1 + $0x50] sm:$0xff]
  %v54 = vld [vmem:[%s1 + $0x58] sm:$0xff]
  %v55 = vld [vmem:[%s1 + $0x60] sm:$0xff]
  %v56 = vld [vmem:[%s1 + $0x68] sm:$0xff]
  %v57 = vld [vmem:[%s1 + $0x70] sm:$0xff]
  %v58 = vld [vmem:[%s1 + $0x78] sm:$0xff]
  %v59 = vld [vmem:[%s1 + $0x80] sm:$0xff]
  %v60 = vld [vmem:[%s1 + $0x88] sm:$0xff]
  %v61 = vld [vmem:[%s1 + $0x90] sm:$0xff]
  %v62 = vld [vmem:[%s1 + $0x98] sm:$0xff]
  %v63 = vld [vmem:[%s1 + $0xa0] sm:$0xff]
  %v64 = vld [vmem:[%s1 + $0xa8] sm:$0xff]
  %v65 = vld [vmem:[%s1 + $0xb0] sm:$0xff]
  %v66 = vld [vmem:[%s1 + $0xb8] sm:$0xff]
  %v67 = vld [vmem:[%s1 + $0xc0] sm:$0xff]
  %v68 = vld [vmem:[%s1 + $0xc8] sm:$0xff]
  %v69 = vld [vmem:[%s1 + $0xd0] sm:$0xff]
  %v70 = vld [vmem:[%s1 + $0xd8] sm:$0xff]
  %v71 = vld [vmem:[%s1 + $0xe0] sm:$0xff]
  %v72 = vld [vmem:[%s1 + $0xe8] sm:$0xff]
  %v73 = vld [vmem:[%s1 + $0xf0] sm:$0xff]
  %v74 = vld [vmem:[%s1 + $0xf8] sm:$0xff]
  %vm75 = vcmask 64512
  %v77 = vsel %vm75, %v11, 0
  %79 = vmatprep.subr.mxu0 0.0
  %80 = vmatpush1.msra.mxu0 0.0
  %81 = vmatprep.subr.mxu0 0.0
  %82 = vmatpush1.msra.mxu0 0.0
  %83 = vmatprep.subr.mxu0 0.0
  %84 = vmatpush1.msra.mxu0 0.0
  %85 = vmatprep.subr.mxu0 0.0
  %86 = vmatpush1.msra.mxu0 0.0
  %87 = vmatprep.subr.mxu0 0.0
  %88 = vmatpush1.msra.mxu0 0.0
  %89 = vmatprep.subr.mxu0 0.0
  %90 = vmatpush1.msra.mxu0 0.0
  %91 = vmatprep.subr.mxu0 0.0
  %92 = vmatpush1.msra.mxu0 0.0
  %93 = vmatprep.subr.mxu0 0.0
  %94 = vmatpush1.msra.mxu0 0.0
  %95 = vmatprep.subr.mxu0 0.0
  %96 = vmatpush1.msra.mxu0 0.0
  %97 = vmatprep.subr.mxu0 0.0
  %98 = vmatpush1.msra.mxu0 0.0
  %99 = vmatprep.subr.mxu0 0.0
  %100 = vmatpush1.msra.mxu0 0.0
  %101 = vmatprep.subr.mxu0 0.0
  %102 = vmatpush1.msra.mxu0 0.0
  %103 = vmatprep.subr.mxu0 0.0
  %104 = vmatpush1.msra.mxu0 0.0
  %105 = vmatprep.subr.mxu0 0.0
  %106 = vmatpush1.msra.mxu0 0.0
  %107 = vmatprep.subr.mxu0 0.0
  %108 = vmatpush1.msra.mxu0 0.0
  %109 = vmatprep.subr.mxu0 0.0
  %110 = vmatpush1.msra.mxu0 %v43
  %111 = vmatprep.subr.mxu0 0.0
  %112 = vmatpush2.msra.mxu0 0.0
  %113 = vmatprep.subr.mxu0 0.0
  %114 = vmatpush2.msra.mxu0 0.0
  %115 = vmatprep.subr.mxu0 0.0
  %116 = vmatpush2.msra.mxu0 0.0
  %117 = vmatprep.subr.mxu0 0.0
  %118 = vmatpush2.msra.mxu0 0.0
  %119 = vmatprep.subr.mxu0 0.0
  %120 = vmatpush2.msra.mxu0 0.0
  %121 = vmatprep.subr.mxu0 0.0
  %122 = vmatpush2.msra.mxu0 0.0
  %123 = vmatprep.subr.mxu0 0.0
  %124 = vmatpush2.msra.mxu0 0.0
  %125 = vmatprep.subr.mxu0 0.0
  %126 = vmatpush2.msra.mxu0 0.0
  %127 = vmatprep.subr.mxu0 0.0
  %128 = vmatpush2.msra.mxu0 0.0
  %129 = vmatprep.subr.mxu0 0.0
  %130 = vmatpush2.msra.mxu0 0.0
  %131 = vmatprep.subr.mxu0 0.0
  %132 = vmatpush2.msra.mxu0 0.0
  %133 = vmatprep.subr.mxu0 0.0
  %134 = vmatpush2.msra.mxu0 0.0
  %135 = vmatprep.subr.mxu0 0.0
  %136 = vmatpush2.msra.mxu0 0.0
  %137 = vmatprep.subr.mxu0 0.0
  %138 = vmatpush2.msra.mxu0 0.0
  %139 = vmatprep.subr.mxu0 0.0
  %140 = vmatpush2.msra.mxu0 0.0
  %141 = vmatprep.subr.mxu0 0.0
  %142 = vmatpush2.msra.mxu0 0.0
  %143 = vmatprep.mubr.f32.mxu0 0.0
  %144 = vmatmul.mubr.f32.gmra.mxu0 %v77
  %v145 = vpop.f32.mrf.mxu0
  %v146 = vadd.f32 0.0, %v145
  %v147 = vpop.f32.mrf.mxu0
  %148 = vdwg.mxu0
  %v150 = vsel %vm75, %v12, 0
  %152 = vmatprep.subr.mxu0 0.0
  %153 = vmatpush1.msra.mxu0 0.0
  %154 = vmatprep.subr.mxu0 0.0
  %155 = vmatpush1.msra.mxu0 0.0
  %156 = vmatprep.subr.mxu0 0.0
  %157 = vmatpush1.msra.mxu0 0.0
  %158 = vmatprep.subr.mxu0 0.0
  %159 = vmatpush1.msra.mxu0 0.0
  %160 = vmatprep.subr.mxu0 0.0
  %161 = vmatpush1.msra.mxu0 0.0
  %162 = vmatprep.subr.mxu0 0.0
  %163 = vmatpush1.msra.mxu0 0.0
  %164 = vmatprep.subr.mxu0 0.0
  %165 = vmatpush1.msra.mxu0 0.0
  %166 = vmatprep.subr.mxu0 0.0
  %167 = vmatpush1.msra.mxu0 0.0
  %168 = vmatprep.subr.mxu0 0.0
  %169 = vmatpush1.msra.mxu0 0.0
  %170 = vmatprep.subr.mxu0 0.0
  %171 = vmatpush1.msra.mxu0 0.0
  %172 = vmatprep.subr.mxu0 0.0
  %173 = vmatpush1.msra.mxu0 0.0
  %174 = vmatprep.subr.mxu0 0.0
  %175 = vmatpush1.msra.mxu0 0.0
  %176 = vmatprep.subr.mxu0 0.0
  %177 = vmatpush1.msra.mxu0 0.0
  %178 = vmatprep.subr.mxu0 0.0
  %179 = vmatpush1.msra.mxu0 0.0
  %180 = vmatprep.subr.mxu0 0.0
  %181 = vmatpush1.msra.mxu0 0.0
  %182 = vmatprep.subr.mxu0 0.0
  %183 = vmatpush1.msra.mxu0 %v44
  %184 = vmatprep.subr.mxu0 0.0
  %185 = vmatpush2.msra.mxu0 0.0
  %186 = vmatprep.subr.mxu0 0.0
  %187 = vmatpush2.msra.mxu0 0.0
  %188 = vmatprep.subr.mxu0 0.0
  %189 = vmatpush2.msra.mxu0 0.0
  %190 = vmatprep.subr.mxu0 0.0
  %191 = vmatpush2.msra.mxu0 0.0
  %192 = vmatprep.subr.mxu0 0.0
  %193 = vmatpush2.msra.mxu0 0.0
  %194 = vmatprep.subr.mxu0 0.0
  %195 = vmatpush2.msra.mxu0 0.0
  %196 = vmatprep.subr.mxu0 0.0
  %197 = vmatpush2.msra.mxu0 0.0
  %198 = vmatprep.subr.mxu0 0.0
  %199 = vmatpush2.msra.mxu0 0.0
  %200 = vmatprep.subr.mxu0 0.0
  %201 = vmatpush2.msra.mxu0 0.0
  %202 = vmatprep.subr.mxu0 0.0
  %203 = vmatpush2.msra.mxu0 0.0
  %204 = vmatprep.subr.mxu0 0.0
  %205 = vmatpush2.msra.mxu0 0.0
  %206 = vmatprep.subr.mxu0 0.0
  %207 = vmatpush2.msra.mxu0 0.0
  %208 = vmatprep.subr.mxu0 0.0
  %209 = vmatpush2.msra.mxu0 0.0
  %210 = vmatprep.subr.mxu0 0.0
  %211 = vmatpush2.msra.mxu0 0.0
  %212 = vmatprep.subr.mxu0 0.0
  %213 = vmatpush2.msra.mxu0 0.0
  %214 = vmatprep.subr.mxu0 0.0
  %215 = vmatpush2.msra.mxu0 0.0
  %216 = vmatprep.mubr.f32.mxu0 0.0
  %217 = vmatmul.mubr.f32.gmra.mxu0 %v150
  %v218 = vpop.f32.mrf.mxu0
  %v219 = vadd.f32 0.0, %v218
  %v220 = vpop.f32.mrf.mxu0
  %221 = vdwg.mxu0
  %v223 = vsel %vm75, %v13, 0
  %225 = vmatprep.subr.mxu0 0.0
  %226 = vmatpush1.msra.mxu0 0.0
  %227 = vmatprep.subr.mxu0 0.0
  %228 = vmatpush1.msra.mxu0 0.0
  %229 = vmatprep.subr.mxu0 0.0
  %230 = vmatpush1.msra.mxu0 0.0
  %231 = vmatprep.subr.mxu0 0.0
  %232 = vmatpush1.msra.mxu0 0.0
  %233 = vmatprep.subr.mxu0 0.0
  %234 = vmatpush1.msra.mxu0 0.0
  %235 = vmatprep.subr.mxu0 0.0
  %236 = vmatpush1.msra.mxu0 0.0
  %237 = vmatprep.subr.mxu0 0.0
  %238 = vmatpush1.msra.mxu0 0.0
  %239 = vmatprep.subr.mxu0 0.0
  %240 = vmatpush1.msra.mxu0 0.0
  %241 = vmatprep.subr.mxu0 0.0
  %242 = vmatpush1.msra.mxu0 0.0
  %243 = vmatprep.subr.mxu0 0.0
  %244 = vmatpush1.msra.mxu0 0.0
  %245 = vmatprep.subr.mxu0 0.0
  %246 = vmatpush1.msra.mxu0 0.0
  %247 = vmatprep.subr.mxu0 0.0
  %248 = vmatpush1.msra.mxu0 0.0
  %249 = vmatprep.subr.mxu0 0.0
  %250 = vmatpush1.msra.mxu0 0.0
  %251 = vmatprep.subr.mxu0 0.0
  %252 = vmatpush1.msra.mxu0 0.0
  %253 = vmatprep.subr.mxu0 0.0
  %254 = vmatpush1.msra.mxu0 0.0
  %255 = vmatprep.subr.mxu0 0.0
  %256 = vmatpush1.msra.mxu0 %v45
  %257 = vmatprep.subr.mxu0 0.0
  %258 = vmatpush2.msra.mxu0 0.0
  %259 = vmatprep.subr.mxu0 0.0
  %260 = vmatpush2.msra.mxu0 0.0
  %261 = vmatprep.subr.mxu0 0.0
  %262 = vmatpush2.msra.mxu0 0.0
  %263 = vmatprep.subr.mxu0 0.0
  %264 = vmatpush2.msra.mxu0 0.0
  %265 = vmatprep.subr.mxu0 0.0
  %266 = vmatpush2.msra.mxu0 0.0
  %267 = vmatprep.subr.mxu0 0.0
  %268 = vmatpush2.msra.mxu0 0.0
  %269 = vmatprep.subr.mxu0 0.0
  %270 = vmatpush2.msra.mxu0 0.0
  %271 = vmatprep.subr.mxu0 0.0
  %272 = vmatpush2.msra.mxu0 0.0
  %273 = vmatprep.subr.mxu0 0.0
  %274 = vmatpush2.msra.mxu0 0.0
  %275 = vmatprep.subr.mxu0 0.0
  %276 = vmatpush2.msra.mxu0 0.0
  %277 = vmatprep.subr.mxu0 0.0
  %278 = vmatpush2.msra.mxu0 0.0
  %279 = vmatprep.subr.mxu0 0.0
  %280 = vmatpush2.msra.mxu0 0.0
  %281 = vmatprep.subr.mxu0 0.0
  %282 = vmatpush2.msra.mxu0 0.0
  %283 = vmatprep.subr.mxu0 0.0
  %284 = vmatpush2.msra.mxu0 0.0
  %285 = vmatprep.subr.mxu0 0.0
  %286 = vmatpush2.msra.mxu0 0.0
  %287 = vmatprep.subr.mxu0 0.0
  %288 = vmatpush2.msra.mxu0 0.0
  %289 = vmatprep.mubr.f32.mxu0 0.0
  %290 = vmatmul.mubr.f32.gmra.mxu0 %v223
  %v291 = vpop.f32.mrf.mxu0
  %v292 = vadd.f32 0.0, %v291
  %v293 = vpop.f32.mrf.mxu0
  %294 = vdwg.mxu0
  %v296 = vsel %vm75, %v14, 0
  %298 = vmatprep.subr.mxu0 0.0
  %299 = vmatpush1.msra.mxu0 0.0
  %300 = vmatprep.subr.mxu0 0.0
  %301 = vmatpush1.msra.mxu0 0.0
  %302 = vmatprep.subr.mxu0 0.0
  %303 = vmatpush1.msra.mxu0 0.0
  %304 = vmatprep.subr.mxu0 0.0
  %305 = vmatpush1.msra.mxu0 0.0
  %306 = vmatprep.subr.mxu0 0.0
  %307 = vmatpush1.msra.mxu0 0.0
  %308 = vmatprep.subr.mxu0 0.0
  %309 = vmatpush1.msra.mxu0 0.0
  %310 = vmatprep.subr.mxu0 0.0
  %311 = vmatpush1.msra.mxu0 0.0
  %312 = vmatprep.subr.mxu0 0.0
  %313 = vmatpush1.msra.mxu0 0.0
  %314 = vmatprep.subr.mxu0 0.0
  %315 = vmatpush1.msra.mxu0 0.0
  %316 = vmatprep.subr.mxu0 0.0
  %317 = vmatpush1.msra.mxu0 0.0
  %318 = vmatprep.subr.mxu0 0.0
  %319 = vmatpush1.msra.mxu0 0.0
  %320 = vmatprep.subr.mxu0 0.0
  %321 = vmatpush1.msra.mxu0 0.0
  %322 = vmatprep.subr.mxu0 0.0
  %323 = vmatpush1.msra.mxu0 0.0
  %324 = vmatprep.subr.mxu0 0.0
  %325 = vmatpush1.msra.mxu0 0.0
  %326 = vmatprep.subr.mxu0 0.0
  %327 = vmatpush1.msra.mxu0 0.0
  %328 = vmatprep.subr.mxu0 0.0
  %329 = vmatpush1.msra.mxu0 %v46
  %330 = vmatprep.subr.mxu0 0.0
  %331 = vmatpush2.msra.mxu0 0.0
  %332 = vmatprep.subr.mxu0 0.0
  %333 = vmatpush2.msra.mxu0 0.0
  %334 = vmatprep.subr.mxu0 0.0
  %335 = vmatpush2.msra.mxu0 0.0
  %336 = vmatprep.subr.mxu0 0.0
  %337 = vmatpush2.msra.mxu0 0.0
  %338 = vmatprep.subr.mxu0 0.0
  %339 = vmatpush2.msra.mxu0 0.0
  %340 = vmatprep.subr.mxu0 0.0
  %341 = vmatpush2.msra.mxu0 0.0
  %342 = vmatprep.subr.mxu0 0.0
  %343 = vmatpush2.msra.mxu0 0.0
  %344 = vmatprep.subr.mxu0 0.0
  %345 = vmatpush2.msra.mxu0 0.0
  %346 = vmatprep.subr.mxu0 0.0
  %347 = vmatpush2.msra.mxu0 0.0
  %348 = vmatprep.subr.mxu0 0.0
  %349 = vmatpush2.msra.mxu0 0.0
  %350 = vmatprep.subr.mxu0 0.0
  %351 = vmatpush2.msra.mxu0 0.0
  %352 = vmatprep.subr.mxu0 0.0
  %353 = vmatpush2.msra.mxu0 0.0
  %354 = vmatprep.subr.mxu0 0.0
  %355 = vmatpush2.msra.mxu0 0.0
  %356 = vmatprep.subr.mxu0 0.0
  %357 = vmatpush2.msra.mxu0 0.0
  %358 = vmatprep.subr.mxu0 0.0
  %359 = vmatpush2.msra.mxu0 0.0
  %360 = vmatprep.subr.mxu0 0.0
  %361 = vmatpush2.msra.mxu0 0.0
  %362 = vmatprep.mubr.f32.mxu0 0.0
  %363 = vmatmul.mubr.f32.gmra.mxu0 %v296
  %v364 = vpop.f32.mrf.mxu0
  %v365 = vadd.f32 0.0, %v364
  %v366 = vpop.f32.mrf.mxu0
  %367 = vdwg.mxu0
  %v369 = vsel %vm75, %v15, 0
  %371 = vmatprep.subr.mxu0 0.0
  %372 = vmatpush1.msra.mxu0 0.0
  %373 = vmatprep.subr.mxu0 0.0
  %374 = vmatpush1.msra.mxu0 0.0
  %375 = vmatprep.subr.mxu0 0.0
  %376 = vmatpush1.msra.mxu0 0.0
  %377 = vmatprep.subr.mxu0 0.0
  %378 = vmatpush1.msra.mxu0 0.0
  %379 = vmatprep.subr.mxu0 0.0
  %380 = vmatpush1.msra.mxu0 0.0
  %381 = vmatprep.subr.mxu0 0.0
  %382 = vmatpush1.msra.mxu0 0.0
  %383 = vmatprep.subr.mxu0 0.0
  %384 = vmatpush1.msra.mxu0 0.0
  %385 = vmatprep.subr.mxu0 0.0
  %386 = vmatpush1.msra.mxu0 0.0
  %387 = vmatprep.subr.mxu0 0.0
  %388 = vmatpush1.msra.mxu0 0.0
  %389 = vmatprep.subr.mxu0 0.0
  %390 = vmatpush1.msra.mxu0 0.0
  %391 = vmatprep.subr.mxu0 0.0
  %392 = vmatpush1.msra.mxu0 0.0
  %393 = vmatprep.subr.mxu0 0.0
  %394 = vmatpush1.msra.mxu0 0.0
  %395 = vmatprep.subr.mxu0 0.0
  %396 = vmatpush1.msra.mxu0 0.0
  %397 = vmatprep.subr.mxu0 0.0
  %398 = vmatpush1.msra.mxu0 0.0
  %399 = vmatprep.subr.mxu0 0.0
  %400 = vmatpush1.msra.mxu0 0.0
  %401 = vmatprep.subr.mxu0 0.0
  %402 = vmatpush1.msra.mxu0 %v47
  %403 = vmatprep.subr.mxu0 0.0
  %404 = vmatpush2.msra.mxu0 0.0
  %405 = vmatprep.subr.mxu0 0.0
  %406 = vmatpush2.msra.mxu0 0.0
  %407 = vmatprep.subr.mxu0 0.0
  %408 = vmatpush2.msra.mxu0 0.0
  %409 = vmatprep.subr.mxu0 0.0
  %410 = vmatpush2.msra.mxu0 0.0
  %411 = vmatprep.subr.mxu0 0.0
  %412 = vmatpush2.msra.mxu0 0.0
  %413 = vmatprep.subr.mxu0 0.0
  %414 = vmatpush2.msra.mxu0 0.0
  %415 = vmatprep.subr.mxu0 0.0
  %416 = vmatpush2.msra.mxu0 0.0
  %417 = vmatprep.subr.mxu0 0.0
  %418 = vmatpush2.msra.mxu0 0.0
  %419 = vmatprep.subr.mxu0 0.0
  %420 = vmatpush2.msra.mxu0 0.0
  %421 = vmatprep.subr.mxu0 0.0
  %422 = vmatpush2.msra.mxu0 0.0
  %423 = vmatprep.subr.mxu0 0.0
  %424 = vmatpush2.msra.mxu0 0.0
  %425 = vmatprep.subr.mxu0 0.0
  %426 = vmatpush2.msra.mxu0 0.0
  %427 = vmatprep.subr.mxu0 0.0
  %428 = vmatpush2.msra.mxu0 0.0
  %429 = vmatprep.subr.mxu0 0.0
  %430 = vmatpush2.msra.mxu0 0.0
  %431 = vmatprep.subr.mxu0 0.0
  %432 = vmatpush2.msra.mxu0 0.0
  %433 = vmatprep.subr.mxu0 0.0
  %434 = vmatpush2.msra.mxu0 0.0
  %435 = vmatprep.mubr.f32.mxu0 0.0
  %436 = vmatmul.mubr.f32.gmra.mxu0 %v369
  %v437 = vpop.f32.mrf.mxu0
  %v438 = vadd.f32 0.0, %v437
  %v439 = vpop.f32.mrf.mxu0
  %440 = vdwg.mxu0
  %v442 = vsel %vm75, %v16, 0
  %444 = vmatprep.subr.mxu0 0.0
  %445 = vmatpush1.msra.mxu0 0.0
  %446 = vmatprep.subr.mxu0 0.0
  %447 = vmatpush1.msra.mxu0 0.0
  %448 = vmatprep.subr.mxu0 0.0
  %449 = vmatpush1.msra.mxu0 0.0
  %450 = vmatprep.subr.mxu0 0.0
  %451 = vmatpush1.msra.mxu0 0.0
  %452 = vmatprep.subr.mxu0 0.0
  %453 = vmatpush1.msra.mxu0 0.0
  %454 = vmatprep.subr.mxu0 0.0
  %455 = vmatpush1.msra.mxu0 0.0
  %456 = vmatprep.subr.mxu0 0.0
  %457 = vmatpush1.msra.mxu0 0.0
  %458 = vmatprep.subr.mxu0 0.0
  %459 = vmatpush1.msra.mxu0 0.0
  %460 = vmatprep.subr.mxu0 0.0
  %461 = vmatpush1.msra.mxu0 0.0
  %462 = vmatprep.subr.mxu0 0.0
  %463 = vmatpush1.msra.mxu0 0.0
  %464 = vmatprep.subr.mxu0 0.0
  %465 = vmatpush1.msra.mxu0 0.0
  %466 = vmatprep.subr.mxu0 0.0
  %467 = vmatpush1.msra.mxu0 0.0
  %468 = vmatprep.subr.mxu0 0.0
  %469 = vmatpush1.msra.mxu0 0.0
  %470 = vmatprep.subr.mxu0 0.0
  %471 = vmatpush1.msra.mxu0 0.0
  %472 = vmatprep.subr.mxu0 0.0
  %473 = vmatpush1.msra.mxu0 0.0
  %474 = vmatprep.subr.mxu0 0.0
  %475 = vmatpush1.msra.mxu0 %v48
  %476 = vmatprep.subr.mxu0 0.0
  %477 = vmatpush2.msra.mxu0 0.0
  %478 = vmatprep.subr.mxu0 0.0
  %479 = vmatpush2.msra.mxu0 0.0
  %480 = vmatprep.subr.mxu0 0.0
  %481 = vmatpush2.msra.mxu0 0.0
  %482 = vmatprep.subr.mxu0 0.0
  %483 = vmatpush2.msra.mxu0 0.0
  %484 = vmatprep.subr.mxu0 0.0
  %485 = vmatpush2.msra.mxu0 0.0
  %486 = vmatprep.subr.mxu0 0.0
  %487 = vmatpush2.msra.mxu0 0.0
  %488 = vmatprep.subr.mxu0 0.0
  %489 = vmatpush2.msra.mxu0 0.0
  %490 = vmatprep.subr.mxu0 0.0
  %491 = vmatpush2.msra.mxu0 0.0
  %492 = vmatprep.subr.mxu0 0.0
  %493 = vmatpush2.msra.mxu0 0.0
  %494 = vmatprep.subr.mxu0 0.0
  %495 = vmatpush2.msra.mxu0 0.0
  %496 = vmatprep.subr.mxu0 0.0
  %497 = vmatpush2.msra.mxu0 0.0
  %498 = vmatprep.subr.mxu0 0.0
  %499 = vmatpush2.msra.mxu0 0.0
  %500 = vmatprep.subr.mxu0 0.0
  %501 = vmatpush2.msra.mxu0 0.0
  %502 = vmatprep.subr.mxu0 0.0
  %503 = vmatpush2.msra.mxu0 0.0
  %504 = vmatprep.subr.mxu0 0.0
  %505 = vmatpush2.msra.mxu0 0.0
  %506 = vmatprep.subr.mxu0 0.0
  %507 = vmatpush2.msra.mxu0 0.0
  %508 = vmatprep.mubr.f32.mxu0 0.0
  %509 = vmatmul.mubr.f32.gmra.mxu0 %v442
  %v510 = vpop.f32.mrf.mxu0
  %v511 = vadd.f32 0.0, %v510
  %v512 = vpop.f32.mrf.mxu0
  %513 = vdwg.mxu0
  %v515 = vsel %vm75, %v17, 0
  %517 = vmatprep.subr.mxu0 0.0
  %518 = vmatpush1.msra.mxu0 0.0
  %519 = vmatprep.subr.mxu0 0.0
  %520 = vmatpush1.msra.mxu0 0.0
  %521 = vmatprep.subr.mxu0 0.0
  %522 = vmatpush1.msra.mxu0 0.0
  %523 = vmatprep.subr.mxu0 0.0
  %524 = vmatpush1.msra.mxu0 0.0
  %525 = vmatprep.subr.mxu0 0.0
  %526 = vmatpush1.msra.mxu0 0.0
  %527 = vmatprep.subr.mxu0 0.0
  %528 = vmatpush1.msra.mxu0 0.0
  %529 = vmatprep.subr.mxu0 0.0
  %530 = vmatpush1.msra.mxu0 0.0
  %531 = vmatprep.subr.mxu0 0.0
  %532 = vmatpush1.msra.mxu0 0.0
  %533 = vmatprep.subr.mxu0 0.0
  %534 = vmatpush1.msra.mxu0 0.0
  %535 = vmatprep.subr.mxu0 0.0
  %536 = vmatpush1.msra.mxu0 0.0
  %537 = vmatprep.subr.mxu0 0.0
  %538 = vmatpush1.msra.mxu0 0.0
  %539 = vmatprep.subr.mxu0 0.0
  %540 = vmatpush1.msra.mxu0 0.0
  %541 = vmatprep.subr.mxu0 0.0
  %542 = vmatpush1.msra.mxu0 0.0
  %543 = vmatprep.subr.mxu0 0.0
  %544 = vmatpush1.msra.mxu0 0.0
  %545 = vmatprep.subr.mxu0 0.0
  %546 = vmatpush1.msra.mxu0 0.0
  %547 = vmatprep.subr.mxu0 0.0
  %548 = vmatpush1.msra.mxu0 %v49
  %549 = vmatprep.subr.mxu0 0.0
  %550 = vmatpush2.msra.mxu0 0.0
  %551 = vmatprep.subr.mxu0 0.0
  %552 = vmatpush2.msra.mxu0 0.0
  %553 = vmatprep.subr.mxu0 0.0
  %554 = vmatpush2.msra.mxu0 0.0
  %555 = vmatprep.subr.mxu0 0.0
  %556 = vmatpush2.msra.mxu0 0.0
  %557 = vmatprep.subr.mxu0 0.0
  %558 = vmatpush2.msra.mxu0 0.0
  %559 = vmatprep.subr.mxu0 0.0
  %560 = vmatpush2.msra.mxu0 0.0
  %561 = vmatprep.subr.mxu0 0.0
  %562 = vmatpush2.msra.mxu0 0.0
  %563 = vmatprep.subr.mxu0 0.0
  %564 = vmatpush2.msra.mxu0 0.0
  %565 = vmatprep.subr.mxu0 0.0
  %566 = vmatpush2.msra.mxu0 0.0
  %567 = vmatprep.subr.mxu0 0.0
  %568 = vmatpush2.msra.mxu0 0.0
  %569 = vmatprep.subr.mxu0 0.0
  %570 = vmatpush2.msra.mxu0 0.0
  %571 = vmatprep.subr.mxu0 0.0
  %572 = vmatpush2.msra.mxu0 0.0
  %573 = vmatprep.subr.mxu0 0.0
  %574 = vmatpush2.msra.mxu0 0.0
  %575 = vmatprep.subr.mxu0 0.0
  %576 = vmatpush2.msra.mxu0 0.0
  %577 = vmatprep.subr.mxu0 0.0
  %578 = vmatpush2.msra.mxu0 0.0
  %579 = vmatprep.subr.mxu0 0.0
  %580 = vmatpush2.msra.mxu0 0.0
  %581 = vmatprep.mubr.f32.mxu0 0.0
  %582 = vmatmul.mubr.f32.gmra.mxu0 %v515
  %v583 = vpop.f32.mrf.mxu0
  %v584 = vadd.f32 0.0, %v583
  %v585 = vpop.f32.mrf.mxu0
  %586 = vdwg.mxu0
  %v588 = vsel %vm75, %v18, 0
  %590 = vmatprep.subr.mxu0 0.0
  %591 = vmatpush1.msra.mxu0 0.0
  %592 = vmatprep.subr.mxu0 0.0
  %593 = vmatpush1.msra.mxu0 0.0
  %594 = vmatprep.subr.mxu0 0.0
  %595 = vmatpush1.msra.mxu0 0.0
  %596 = vmatprep.subr.mxu0 0.0
  %597 = vmatpush1.msra.mxu0 0.0
  %598 = vmatprep.subr.mxu0 0.0
  %599 = vmatpush1.msra.mxu0 0.0
  %600 = vmatprep.subr.mxu0 0.0
  %601 = vmatpush1.msra.mxu0 0.0
  %602 = vmatprep.subr.mxu0 0.0
  %603 = vmatpush1.msra.mxu0 0.0
  %604 = vmatprep.subr.mxu0 0.0
  %605 = vmatpush1.msra.mxu0 0.0
  %606 = vmatprep.subr.mxu0 0.0
  %607 = vmatpush1.msra.mxu0 0.0
  %608 = vmatprep.subr.mxu0 0.0
  %609 = vmatpush1.msra.mxu0 0.0
  %610 = vmatprep.subr.mxu0 0.0
  %611 = vmatpush1.msra.mxu0 0.0
  %612 = vmatprep.subr.mxu0 0.0
  %613 = vmatpush1.msra.mxu0 0.0
  %614 = vmatprep.subr.mxu0 0.0
  %615 = vmatpush1.msra.mxu0 0.0
  %616 = vmatprep.subr.mxu0 0.0
  %617 = vmatpush1.msra.mxu0 0.0
  %618 = vmatprep.subr.mxu0 0.0
  %619 = vmatpush1.msra.mxu0 0.0
  %620 = vmatprep.subr.mxu0 0.0
  %621 = vmatpush1.msra.mxu0 %v50
  %622 = vmatprep.subr.mxu0 0.0
  %623 = vmatpush2.msra.mxu0 0.0
  %624 = vmatprep.subr.mxu0 0.0
  %625 = vmatpush2.msra.mxu0 0.0
  %626 = vmatprep.subr.mxu0 0.0
  %627 = vmatpush2.msra.mxu0 0.0
  %628 = vmatprep.subr.mxu0 0.0
  %629 = vmatpush2.msra.mxu0 0.0
  %630 = vmatprep.subr.mxu0 0.0
  %631 = vmatpush2.msra.mxu0 0.0
  %632 = vmatprep.subr.mxu0 0.0
  %633 = vmatpush2.msra.mxu0 0.0
  %634 = vmatprep.subr.mxu0 0.0
  %635 = vmatpush2.msra.mxu0 0.0
  %636 = vmatprep.subr.mxu0 0.0
  %637 = vmatpush2.msra.mxu0 0.0
  %638 = vmatprep.subr.mxu0 0.0
  %639 = vmatpush2.msra.mxu0 0.0
  %640 = vmatprep.subr.mxu0 0.0
  %641 = vmatpush2.msra.mxu0 0.0
  %642 = vmatprep.subr.mxu0 0.0
  %643 = vmatpush2.msra.mxu0 0.0
  %644 = vmatprep.subr.mxu0 0.0
  %645 = vmatpush2.msra.mxu0 0.0
  %646 = vmatprep.subr.mxu0 0.0
  %647 = vmatpush2.msra.mxu0 0.0
  %648 = vmatprep.subr.mxu0 0.0
  %649 = vmatpush2.msra.mxu0 0.0
  %650 = vmatprep.subr.mxu0 0.0
  %651 = vmatpush2.msra.mxu0 0.0
  %652 = vmatprep.subr.mxu0 0.0
  %653 = vmatpush2.msra.mxu0 0.0
  %654 = vmatprep.mubr.f32.mxu0 0.0
  %655 = vmatmul.mubr.f32.gmra.mxu0 %v588
  %v656 = vpop.f32.mrf.mxu0
  %v657 = vadd.f32 0.0, %v656
  %v658 = vpop.f32.mrf.mxu0
  %659 = vdwg.mxu0
  %v661 = vsel %vm75, %v19, 0
  %663 = vmatprep.subr.mxu0 0.0
  %664 = vmatpush1.msra.mxu0 0.0
  %665 = vmatprep.subr.mxu0 0.0
  %666 = vmatpush1.msra.mxu0 0.0
  %667 = vmatprep.subr.mxu0 0.0
  %668 = vmatpush1.msra.mxu0 0.0
  %669 = vmatprep.subr.mxu0 0.0
  %670 = vmatpush1.msra.mxu0 0.0
  %671 = vmatprep.subr.mxu0 0.0
  %672 = vmatpush1.msra.mxu0 0.0
  %673 = vmatprep.subr.mxu0 0.0
  %674 = vmatpush1.msra.mxu0 0.0
  %675 = vmatprep.subr.mxu0 0.0
  %676 = vmatpush1.msra.mxu0 0.0
  %677 = vmatprep.subr.mxu0 0.0
  %678 = vmatpush1.msra.mxu0 0.0
  %679 = vmatprep.subr.mxu0 0.0
  %680 = vmatpush1.msra.mxu0 0.0
  %681 = vmatprep.subr.mxu0 0.0
  %682 = vmatpush1.msra.mxu0 0.0
  %683 = vmatprep.subr.mxu0 0.0
  %684 = vmatpush1.msra.mxu0 0.0
  %685 = vmatprep.subr.mxu0 0.0
  %686 = vmatpush1.msra.mxu0 0.0
  %687 = vmatprep.subr.mxu0 0.0
  %688 = vmatpush1.msra.mxu0 0.0
  %689 = vmatprep.subr.mxu0 0.0
  %690 = vmatpush1.msra.mxu0 0.0
  %691 = vmatprep.subr.mxu0 0.0
  %692 = vmatpush1.msra.mxu0 0.0
  %693 = vmatprep.subr.mxu0 0.0
  %694 = vmatpush1.msra.mxu0 %v51
  %695 = vmatprep.subr.mxu0 0.0
  %696 = vmatpush2.msra.mxu0 0.0
  %697 = vmatprep.subr.mxu0 0.0
  %698 = vmatpush2.msra.mxu0 0.0
  %699 = vmatprep.subr.mxu0 0.0
  %700 = vmatpush2.msra.mxu0 0.0
  %701 = vmatprep.subr.mxu0 0.0
  %702 = vmatpush2.msra.mxu0 0.0
  %703 = vmatprep.subr.mxu0 0.0
  %704 = vmatpush2.msra.mxu0 0.0
  %705 = vmatprep.subr.mxu0 0.0
  %706 = vmatpush2.msra.mxu0 0.0
  %707 = vmatprep.subr.mxu0 0.0
  %708 = vmatpush2.msra.mxu0 0.0
  %709 = vmatprep.subr.mxu0 0.0
  %710 = vmatpush2.msra.mxu0 0.0
  %711 = vmatprep.subr.mxu0 0.0
  %712 = vmatpush2.msra.mxu0 0.0
  %713 = vmatprep.subr.mxu0 0.0
  %714 = vmatpush2.msra.mxu0 0.0
  %715 = vmatprep.subr.mxu0 0.0
  %716 = vmatpush2.msra.mxu0 0.0
  %717 = vmatprep.subr.mxu0 0.0
  %718 = vmatpush2.msra.mxu0 0.0
  %719 = vmatprep.subr.mxu0 0.0
  %720 = vmatpush2.msra.mxu0 0.0
  %721 = vmatprep.subr.mxu0 0.0
  %722 = vmatpush2.msra.mxu0 0.0
  %723 = vmatprep.subr.mxu0 0.0
  %724 = vmatpush2.msra.mxu0 0.0
  %725 = vmatprep.subr.mxu0 0.0
  %726 = vmatpush2.msra.mxu0 0.0
  %727 = vmatprep.mubr.f32.mxu0 0.0
  %728 = vmatmul.mubr.f32.gmra.mxu0 %v661
  %v729 = vpop.f32.mrf.mxu0
  %v730 = vadd.f32 0.0, %v729
  %v731 = vpop.f32.mrf.mxu0
  %732 = vdwg.mxu0
  %v734 = vsel %vm75, %v20, 0
  %736 = vmatprep.subr.mxu0 0.0
  %737 = vmatpush1.msra.mxu0 0.0
  %738 = vmatprep.subr.mxu0 0.0
  %739 = vmatpush1.msra.mxu0 0.0
  %740 = vmatprep.subr.mxu0 0.0
  %741 = vmatpush1.msra.mxu0 0.0
  %742 = vmatprep.subr.mxu0 0.0
  %743 = vmatpush1.msra.mxu0 0.0
  %744 = vmatprep.subr.mxu0 0.0
  %745 = vmatpush1.msra.mxu0 0.0
  %746 = vmatprep.subr.mxu0 0.0
  %747 = vmatpush1.msra.mxu0 0.0
  %748 = vmatprep.subr.mxu0 0.0
  %749 = vmatpush1.msra.mxu0 0.0
  %750 = vmatprep.subr.mxu0 0.0
  %751 = vmatpush1.msra.mxu0 0.0
  %752 = vmatprep.subr.mxu0 0.0
  %753 = vmatpush1.msra.mxu0 0.0
  %754 = vmatprep.subr.mxu0 0.0
  %755 = vmatpush1.msra.mxu0 0.0
  %756 = vmatprep.subr.mxu0 0.0
  %757 = vmatpush1.msra.mxu0 0.0
  %758 = vmatprep.subr.mxu0 0.0
  %759 = vmatpush1.msra.mxu0 0.0
  %760 = vmatprep.subr.mxu0 0.0
  %761 = vmatpush1.msra.mxu0 0.0
  %762 = vmatprep.subr.mxu0 0.0
  %763 = vmatpush1.msra.mxu0 0.0
  %764 = vmatprep.subr.mxu0 0.0
  %765 = vmatpush1.msra.mxu0 0.0
  %766 = vmatprep.subr.mxu0 0.0
  %767 = vmatpush1.msra.mxu0 %v52
  %768 = vmatprep.subr.mxu0 0.0
  %769 = vmatpush2.msra.mxu0 0.0
  %770 = vmatprep.subr.mxu0 0.0
  %771 = vmatpush2.msra.mxu0 0.0
  %772 = vmatprep.subr.mxu0 0.0
  %773 = vmatpush2.msra.mxu0 0.0
  %774 = vmatprep.subr.mxu0 0.0
  %775 = vmatpush2.msra.mxu0 0.0
  %776 = vmatprep.subr.mxu0 0.0
  %777 = vmatpush2.msra.mxu0 0.0
  %778 = vmatprep.subr.mxu0 0.0
  %779 = vmatpush2.msra.mxu0 0.0
  %780 = vmatprep.subr.mxu0 0.0
  %781 = vmatpush2.msra.mxu0 0.0
  %782 = vmatprep.subr.mxu0 0.0
  %783 = vmatpush2.msra.mxu0 0.0
  %784 = vmatprep.subr.mxu0 0.0
  %785 = vmatpush2.msra.mxu0 0.0
  %786 = vmatprep.subr.mxu0 0.0
  %787 = vmatpush2.msra.mxu0 0.0
  %788 = vmatprep.subr.mxu0 0.0
  %789 = vmatpush2.msra.mxu0 0.0
  %790 = vmatprep.subr.mxu0 0.0
  %791 = vmatpush2.msra.mxu0 0.0
  %792 = vmatprep.subr.mxu0 0.0
  %793 = vmatpush2.msra.mxu0 0.0
  %794 = vmatprep.subr.mxu0 0.0
  %795 = vmatpush2.msra.mxu0 0.0
  %796 = vmatprep.subr.mxu0 0.0
  %797 = vmatpush2.msra.mxu0 0.0
  %798 = vmatprep.subr.mxu0 0.0
  %799 = vmatpush2.msra.mxu0 0.0
  %800 = vmatprep.mubr.f32.mxu0 0.0
  %801 = vmatmul.mubr.f32.gmra.mxu0 %v734
  %v802 = vpop.f32.mrf.mxu0
  %v803 = vadd.f32 0.0, %v802
  %v804 = vpop.f32.mrf.mxu0
  %805 = vdwg.mxu0
  %v807 = vsel %vm75, %v21, 0
  %809 = vmatprep.subr.mxu0 0.0
  %810 = vmatpush1.msra.mxu0 0.0
  %811 = vmatprep.subr.mxu0 0.0
  %812 = vmatpush1.msra.mxu0 0.0
  %813 = vmatprep.subr.mxu0 0.0
  %814 = vmatpush1.msra.mxu0 0.0
  %815 = vmatprep.subr.mxu0 0.0
  %816 = vmatpush1.msra.mxu0 0.0
  %817 = vmatprep.subr.mxu0 0.0
  %818 = vmatpush1.msra.mxu0 0.0
  %819 = vmatprep.subr.mxu0 0.0
  %820 = vmatpush1.msra.mxu0 0.0
  %821 = vmatprep.subr.mxu0 0.0
  %822 = vmatpush1.msra.mxu0 0.0
  %823 = vmatprep.subr.mxu0 0.0
  %824 = vmatpush1.msra.mxu0 0.0
  %825 = vmatprep.subr.mxu0 0.0
  %826 = vmatpush1.msra.mxu0 0.0
  %827 = vmatprep.subr.mxu0 0.0
  %828 = vmatpush1.msra.mxu0 0.0
  %829 = vmatprep.subr.mxu0 0.0
  %830 = vmatpush1.msra.mxu0 0.0
  %831 = vmatprep.subr.mxu0 0.0
  %832 = vmatpush1.msra.mxu0 0.0
  %833 = vmatprep.subr.mxu0 0.0
  %834 = vmatpush1.msra.mxu0 0.0
  %835 = vmatprep.subr.mxu0 0.0
  %836 = vmatpush1.msra.mxu0 0.0
  %837 = vmatprep.subr.mxu0 0.0
  %838 = vmatpush1.msra.mxu0 0.0
  %839 = vmatprep.subr.mxu0 0.0
  %840 = vmatpush1.msra.mxu0 %v53
  %841 = vmatprep.subr.mxu0 0.0
  %842 = vmatpush2.msra.mxu0 0.0
  %843 = vmatprep.subr.mxu0 0.0
  %844 = vmatpush2.msra.mxu0 0.0
  %845 = vmatprep.subr.mxu0 0.0
  %846 = vmatpush2.msra.mxu0 0.0
  %847 = vmatprep.subr.mxu0 0.0
  %848 = vmatpush2.msra.mxu0 0.0
  %849 = vmatprep.subr.mxu0 0.0
  %850 = vmatpush2.msra.mxu0 0.0
  %851 = vmatprep.subr.mxu0 0.0
  %852 = vmatpush2.msra.mxu0 0.0
  %853 = vmatprep.subr.mxu0 0.0
  %854 = vmatpush2.msra.mxu0 0.0
  %855 = vmatprep.subr.mxu0 0.0
  %856 = vmatpush2.msra.mxu0 0.0
  %857 = vmatprep.subr.mxu0 0.0
  %858 = vmatpush2.msra.mxu0 0.0
  %859 = vmatprep.subr.mxu0 0.0
  %860 = vmatpush2.msra.mxu0 0.0
  %861 = vmatprep.subr.mxu0 0.0
  %862 = vmatpush2.msra.mxu0 0.0
  %863 = vmatprep.subr.mxu0 0.0
  %864 = vmatpush2.msra.mxu0 0.0
  %865 = vmatprep.subr.mxu0 0.0
  %866 = vmatpush2.msra.mxu0 0.0
  %867 = vmatprep.subr.mxu0 0.0
  %868 = vmatpush2.msra.mxu0 0.0
  %869 = vmatprep.subr.mxu0 0.0
  %870 = vmatpush2.msra.mxu0 0.0
  %871 = vmatprep.subr.mxu0 0.0
  %872 = vmatpush2.msra.mxu0 0.0
  %873 = vmatprep.mubr.f32.mxu0 0.0
  %874 = vmatmul.mubr.f32.gmra.mxu0 %v807
  %v875 = vpop.f32.mrf.mxu0
  %v876 = vadd.f32 0.0, %v875
  %v877 = vpop.f32.mrf.mxu0
  %878 = vdwg.mxu0
  %v880 = vsel %vm75, %v22, 0
  %882 = vmatprep.subr.mxu0 0.0
  %883 = vmatpush1.msra.mxu0 0.0
  %884 = vmatprep.subr.mxu0 0.0
  %885 = vmatpush1.msra.mxu0 0.0
  %886 = vmatprep.subr.mxu0 0.0
  %887 = vmatpush1.msra.mxu0 0.0
  %888 = vmatprep.subr.mxu0 0.0
  %889 = vmatpush1.msra.mxu0 0.0
  %890 = vmatprep.subr.mxu0 0.0
  %891 = vmatpush1.msra.mxu0 0.0
  %892 = vmatprep.subr.mxu0 0.0
  %893 = vmatpush1.msra.mxu0 0.0
  %894 = vmatprep.subr.mxu0 0.0
  %895 = vmatpush1.msra.mxu0 0.0
  %896 = vmatprep.subr.mxu0 0.0
  %897 = vmatpush1.msra.mxu0 0.0
  %898 = vmatprep.subr.mxu0 0.0
  %899 = vmatpush1.msra.mxu0 0.0
  %900 = vmatprep.subr.mxu0 0.0
  %901 = vmatpush1.msra.mxu0 0.0
  %902 = vmatprep.subr.mxu0 0.0
  %903 = vmatpush1.msra.mxu0 0.0
  %904 = vmatprep.subr.mxu0 0.0
  %905 = vmatpush1.msra.mxu0 0.0
  %906 = vmatprep.subr.mxu0 0.0
  %907 = vmatpush1.msra.mxu0 0.0
  %908 = vmatprep.subr.mxu0 0.0
  %909 = vmatpush1.msra.mxu0 0.0
  %910 = vmatprep.subr.mxu0 0.0
  %911 = vmatpush1.msra.mxu0 0.0
  %912 = vmatprep.subr.mxu0 0.0
  %913 = vmatpush1.msra.mxu0 %v54
  %914 = vmatprep.subr.mxu0 0.0
  %915 = vmatpush2.msra.mxu0 0.0
  %916 = vmatprep.subr.mxu0 0.0
  %917 = vmatpush2.msra.mxu0 0.0
  %918 = vmatprep.subr.mxu0 0.0
  %919 = vmatpush2.msra.mxu0 0.0
  %920 = vmatprep.subr.mxu0 0.0
  %921 = vmatpush2.msra.mxu0 0.0
  %922 = vmatprep.subr.mxu0 0.0
  %923 = vmatpush2.msra.mxu0 0.0
  %924 = vmatprep.subr.mxu0 0.0
  %925 = vmatpush2.msra.mxu0 0.0
  %926 = vmatprep.subr.mxu0 0.0
  %927 = vmatpush2.msra.mxu0 0.0
  %928 = vmatprep.subr.mxu0 0.0
  %929 = vmatpush2.msra.mxu0 0.0
  %930 = vmatprep.subr.mxu0 0.0
  %931 = vmatpush2.msra.mxu0 0.0
  %932 = vmatprep.subr.mxu0 0.0
  %933 = vmatpush2.msra.mxu0 0.0
  %934 = vmatprep.subr.mxu0 0.0
  %935 = vmatpush2.msra.mxu0 0.0
  %936 = vmatprep.subr.mxu0 0.0
  %937 = vmatpush2.msra.mxu0 0.0
  %938 = vmatprep.subr.mxu0 0.0
  %939 = vmatpush2.msra.mxu0 0.0
  %940 = vmatprep.subr.mxu0 0.0
  %941 = vmatpush2.msra.mxu0 0.0
  %942 = vmatprep.subr.mxu0 0.0
  %943 = vmatpush2.msra.mxu0 0.0
  %944 = vmatprep.subr.mxu0 0.0
  %945 = vmatpush2.msra.mxu0 0.0
  %946 = vmatprep.mubr.f32.mxu0 0.0
  %947 = vmatmul.mubr.f32.gmra.mxu0 %v880
  %v948 = vpop.f32.mrf.mxu0
  %v949 = vadd.f32 0.0, %v948
  %v950 = vpop.f32.mrf.mxu0
  %951 = vdwg.mxu0
  %v953 = vsel %vm75, %v23, 0
  %955 = vmatprep.subr.mxu0 0.0
  %956 = vmatpush1.msra.mxu0 0.0
  %957 = vmatprep.subr.mxu0 0.0
  %958 = vmatpush1.msra.mxu0 0.0
  %959 = vmatprep.subr.mxu0 0.0
  %960 = vmatpush1.msra.mxu0 0.0
  %961 = vmatprep.subr.mxu0 0.0
  %962 = vmatpush1.msra.mxu0 0.0
  %963 = vmatprep.subr.mxu0 0.0
  %964 = vmatpush1.msra.mxu0 0.0
  %965 = vmatprep.subr.mxu0 0.0
  %966 = vmatpush1.msra.mxu0 0.0
  %967 = vmatprep.subr.mxu0 0.0
  %968 = vmatpush1.msra.mxu0 0.0
  %969 = vmatprep.subr.mxu0 0.0
  %970 = vmatpush1.msra.mxu0 0.0
  %971 = vmatprep.subr.mxu0 0.0
  %972 = vmatpush1.msra.mxu0 0.0
  %973 = vmatprep.subr.mxu0 0.0
  %974 = vmatpush1.msra.mxu0 0.0
  %975 = vmatprep.subr.mxu0 0.0
  %976 = vmatpush1.msra.mxu0 0.0
  %977 = vmatprep.subr.mxu0 0.0
  %978 = vmatpush1.msra.mxu0 0.0
  %979 = vmatprep.subr.mxu0 0.0
  %980 = vmatpush1.msra.mxu0 0.0
  %981 = vmatprep.subr.mxu0 0.0
  %982 = vmatpush1.msra.mxu0 0.0
  %983 = vmatprep.subr.mxu0 0.0
  %984 = vmatpush1.msra.mxu0 0.0
  %985 = vmatprep.subr.mxu0 0.0
  %986 = vmatpush1.msra.mxu0 %v55
  %987 = vmatprep.subr.mxu0 0.0
  %988 = vmatpush2.msra.mxu0 0.0
  %989 = vmatprep.subr.mxu0 0.0
  %990 = vmatpush2.msra.mxu0 0.0
  %991 = vmatprep.subr.mxu0 0.0
  %992 = vmatpush2.msra.mxu0 0.0
  %993 = vmatprep.subr.mxu0 0.0
  %994 = vmatpush2.msra.mxu0 0.0
  %995 = vmatprep.subr.mxu0 0.0
  %996 = vmatpush2.msra.mxu0 0.0
  %997 = vmatprep.subr.mxu0 0.0
  %998 = vmatpush2.msra.mxu0 0.0
  %999 = vmatprep.subr.mxu0 0.0
  %1000 = vmatpush2.msra.mxu0 0.0
  %1001 = vmatprep.subr.mxu0 0.0
  %1002 = vmatpush2.msra.mxu0 0.0
  %1003 = vmatprep.subr.mxu0 0.0
  %1004 = vmatpush2.msra.mxu0 0.0
  %1005 = vmatprep.subr.mxu0 0.0
  %1006 = vmatpush2.msra.mxu0 0.0
  %1007 = vmatprep.subr.mxu0 0.0
  %1008 = vmatpush2.msra.mxu0 0.0
  %1009 = vmatprep.subr.mxu0 0.0
  %1010 = vmatpush2.msra.mxu0 0.0
  %1011 = vmatprep.subr.mxu0 0.0
  %1012 = vmatpush2.msra.mxu0 0.0
  %1013 = vmatprep.subr.mxu0 0.0
  %1014 = vmatpush2.msra.mxu0 0.0
  %1015 = vmatprep.subr.mxu0 0.0
  %1016 = vmatpush2.msra.mxu0 0.0
  %1017 = vmatprep.subr.mxu0 0.0
  %1018 = vmatpush2.msra.mxu0 0.0
  %1019 = vmatprep.mubr.f32.mxu0 0.0
  %1020 = vmatmul.mubr.f32.gmra.mxu0 %v953
  %v1021 = vpop.f32.mrf.mxu0
  %v1022 = vadd.f32 0.0, %v1021
  %v1023 = vpop.f32.mrf.mxu0
  %1024 = vdwg.mxu0
  %v1026 = vsel %vm75, %v24, 0
  %1028 = vmatprep.subr.mxu0 0.0
  %1029 = vmatpush1.msra.mxu0 0.0
  %1030 = vmatprep.subr.mxu0 0.0
  %1031 = vmatpush1.msra.mxu0 0.0
  %1032 = vmatprep.subr.mxu0 0.0
  %1033 = vmatpush1.msra.mxu0 0.0
  %1034 = vmatprep.subr.mxu0 0.0
  %1035 = vmatpush1.msra.mxu0 0.0
  %1036 = vmatprep.subr.mxu0 0.0
  %1037 = vmatpush1.msra.mxu0 0.0
  %1038 = vmatprep.subr.mxu0 0.0
  %1039 = vmatpush1.msra.mxu0 0.0
  %1040 = vmatprep.subr.mxu0 0.0
  %1041 = vmatpush1.msra.mxu0 0.0
  %1042 = vmatprep.subr.mxu0 0.0
  %1043 = vmatpush1.msra.mxu0 0.0
  %1044 = vmatprep.subr.mxu0 0.0
  %1045 = vmatpush1.msra.mxu0 0.0
  %1046 = vmatprep.subr.mxu0 0.0
  %1047 = vmatpush1.msra.mxu0 0.0
  %1048 = vmatprep.subr.mxu0 0.0
  %1049 = vmatpush1.msra.mxu0 0.0
  %1050 = vmatprep.subr.mxu0 0.0
  %1051 = vmatpush1.msra.mxu0 0.0
  %1052 = vmatprep.subr.mxu0 0.0
  %1053 = vmatpush1.msra.mxu0 0.0
  %1054 = vmatprep.subr.mxu0 0.0
  %1055 = vmatpush1.msra.mxu0 0.0
  %1056 = vmatprep.subr.mxu0 0.0
  %1057 = vmatpush1.msra.mxu0 0.0
  %1058 = vmatprep.subr.mxu0 0.0
  %1059 = vmatpush1.msra.mxu0 %v56
  %1060 = vmatprep.subr.mxu0 0.0
  %1061 = vmatpush2.msra.mxu0 0.0
  %1062 = vmatprep.subr.mxu0 0.0
  %1063 = vmatpush2.msra.mxu0 0.0
  %1064 = vmatprep.subr.mxu0 0.0
  %1065 = vmatpush2.msra.mxu0 0.0
  %1066 = vmatprep.subr.mxu0 0.0
  %1067 = vmatpush2.msra.mxu0 0.0
  %1068 = vmatprep.subr.mxu0 0.0
  %1069 = vmatpush2.msra.mxu0 0.0
  %1070 = vmatprep.subr.mxu0 0.0
  %1071 = vmatpush2.msra.mxu0 0.0
  %1072 = vmatprep.subr.mxu0 0.0
  %1073 = vmatpush2.msra.mxu0 0.0
  %1074 = vmatprep.subr.mxu0 0.0
  %1075 = vmatpush2.msra.mxu0 0.0
  %1076 = vmatprep.subr.mxu0 0.0
  %1077 = vmatpush2.msra.mxu0 0.0
  %1078 = vmatprep.subr.mxu0 0.0
  %1079 = vmatpush2.msra.mxu0 0.0
  %1080 = vmatprep.subr.mxu0 0.0
  %1081 = vmatpush2.msra.mxu0 0.0
  %1082 = vmatprep.subr.mxu0 0.0
  %1083 = vmatpush2.msra.mxu0 0.0
  %1084 = vmatprep.subr.mxu0 0.0
  %1085 = vmatpush2.msra.mxu0 0.0
  %1086 = vmatprep.subr.mxu0 0.0
  %1087 = vmatpush2.msra.mxu0 0.0
  %1088 = vmatprep.subr.mxu0 0.0
  %1089 = vmatpush2.msra.mxu0 0.0
  %1090 = vmatprep.subr.mxu0 0.0
  %1091 = vmatpush2.msra.mxu0 0.0
  %1092 = vmatprep.mubr.f32.mxu0 0.0
  %1093 = vmatmul.mubr.f32.gmra.mxu0 %v1026
  %v1094 = vpop.f32.mrf.mxu0
  %v1095 = vadd.f32 0.0, %v1094
  %v1096 = vpop.f32.mrf.mxu0
  %1097 = vdwg.mxu0
  %v1099 = vsel %vm75, %v25, 0
  %1101 = vmatprep.subr.mxu0 0.0
  %1102 = vmatpush1.msra.mxu0 0.0
  %1103 = vmatprep.subr.mxu0 0.0
  %1104 = vmatpush1.msra.mxu0 0.0
  %1105 = vmatprep.subr.mxu0 0.0
  %1106 = vmatpush1.msra.mxu0 0.0
  %1107 = vmatprep.subr.mxu0 0.0
  %1108 = vmatpush1.msra.mxu0 0.0
  %1109 = vmatprep.subr.mxu0 0.0
  %1110 = vmatpush1.msra.mxu0 0.0
  %1111 = vmatprep.subr.mxu0 0.0
  %1112 = vmatpush1.msra.mxu0 0.0
  %1113 = vmatprep.subr.mxu0 0.0
  %1114 = vmatpush1.msra.mxu0 0.0
  %1115 = vmatprep.subr.mxu0 0.0
  %1116 = vmatpush1.msra.mxu0 0.0
  %1117 = vmatprep.subr.mxu0 0.0
  %1118 = vmatpush1.msra.mxu0 0.0
  %1119 = vmatprep.subr.mxu0 0.0
  %1120 = vmatpush1.msra.mxu0 0.0
  %1121 = vmatprep.subr.mxu0 0.0
  %1122 = vmatpush1.msra.mxu0 0.0
  %1123 = vmatprep.subr.mxu0 0.0
  %1124 = vmatpush1.msra.mxu0 0.0
  %1125 = vmatprep.subr.mxu0 0.0
  %1126 = vmatpush1.msra.mxu0 0.0
  %1127 = vmatprep.subr.mxu0 0.0
  %1128 = vmatpush1.msra.mxu0 0.0
  %1129 = vmatprep.subr.mxu0 0.0
  %1130 = vmatpush1.msra.mxu0 0.0
  %1131 = vmatprep.subr.mxu0 0.0
  %1132 = vmatpush1.msra.mxu0 %v57
  %1133 = vmatprep.subr.mxu0 0.0
  %1134 = vmatpush2.msra.mxu0 0.0
  %1135 = vmatprep.subr.mxu0 0.0
  %1136 = vmatpush2.msra.mxu0 0.0
  %1137 = vmatprep.subr.mxu0 0.0
  %1138 = vmatpush2.msra.mxu0 0.0
  %1139 = vmatprep.subr.mxu0 0.0
  %1140 = vmatpush2.msra.mxu0 0.0
  %1141 = vmatprep.subr.mxu0 0.0
  %1142 = vmatpush2.msra.mxu0 0.0
  %1143 = vmatprep.subr.mxu0 0.0
  %1144 = vmatpush2.msra.mxu0 0.0
  %1145 = vmatprep.subr.mxu0 0.0
  %1146 = vmatpush2.msra.mxu0 0.0
  %1147 = vmatprep.subr.mxu0 0.0
  %1148 = vmatpush2.msra.mxu0 0.0
  %1149 = vmatprep.subr.mxu0 0.0
  %1150 = vmatpush2.msra.mxu0 0.0
  %1151 = vmatprep.subr.mxu0 0.0
  %1152 = vmatpush2.msra.mxu0 0.0
  %1153 = vmatprep.subr.mxu0 0.0
  %1154 = vmatpush2.msra.mxu0 0.0
  %1155 = vmatprep.subr.mxu0 0.0
  %1156 = vmatpush2.msra.mxu0 0.0
  %1157 = vmatprep.subr.mxu0 0.0
  %1158 = vmatpush2.msra.mxu0 0.0
  %1159 = vmatprep.subr.mxu0 0.0
  %1160 = vmatpush2.msra.mxu0 0.0
  %1161 = vmatprep.subr.mxu0 0.0
  %1162 = vmatpush2.msra.mxu0 0.0
  %1163 = vmatprep.subr.mxu0 0.0
  %1164 = vmatpush2.msra.mxu0 0.0
  %1165 = vmatprep.mubr.f32.mxu0 0.0
  %1166 = vmatmul.mubr.f32.gmra.mxu0 %v1099
  %v1167 = vpop.f32.mrf.mxu0
  %v1168 = vadd.f32 0.0, %v1167
  %v1169 = vpop.f32.mrf.mxu0
  %1170 = vdwg.mxu0
  %v1172 = vsel %vm75, %v26, 0
  %1174 = vmatprep.subr.mxu0 0.0
  %1175 = vmatpush1.msra.mxu0 0.0
  %1176 = vmatprep.subr.mxu0 0.0
  %1177 = vmatpush1.msra.mxu0 0.0
  %1178 = vmatprep.subr.mxu0 0.0
  %1179 = vmatpush1.msra.mxu0 0.0
  %1180 = vmatprep.subr.mxu0 0.0
  %1181 = vmatpush1.msra.mxu0 0.0
  %1182 = vmatprep.subr.mxu0 0.0
  %1183 = vmatpush1.msra.mxu0 0.0
  %1184 = vmatprep.subr.mxu0 0.0
  %1185 = vmatpush1.msra.mxu0 0.0
  %1186 = vmatprep.subr.mxu0 0.0
  %1187 = vmatpush1.msra.mxu0 0.0
  %1188 = vmatprep.subr.mxu0 0.0
  %1189 = vmatpush1.msra.mxu0 0.0
  %1190 = vmatprep.subr.mxu0 0.0
  %1191 = vmatpush1.msra.mxu0 0.0
  %1192 = vmatprep.subr.mxu0 0.0
  %1193 = vmatpush1.msra.mxu0 0.0
  %1194 = vmatprep.subr.mxu0 0.0
  %1195 = vmatpush1.msra.mxu0 0.0
  %1196 = vmatprep.subr.mxu0 0.0
  %1197 = vmatpush1.msra.mxu0 0.0
  %1198 = vmatprep.subr.mxu0 0.0
  %1199 = vmatpush1.msra.mxu0 0.0
  %1200 = vmatprep.subr.mxu0 0.0
  %1201 = vmatpush1.msra.mxu0 0.0
  %1202 = vmatprep.subr.mxu0 0.0
  %1203 = vmatpush1.msra.mxu0 0.0
  %1204 = vmatprep.subr.mxu0 0.0
  %1205 = vmatpush1.msra.mxu0 %v58
  %1206 = vmatprep.subr.mxu0 0.0
  %1207 = vmatpush2.msra.mxu0 0.0
  %1208 = vmatprep.subr.mxu0 0.0
  %1209 = vmatpush2.msra.mxu0 0.0
  %1210 = vmatprep.subr.mxu0 0.0
  %1211 = vmatpush2.msra.mxu0 0.0
  %1212 = vmatprep.subr.mxu0 0.0
  %1213 = vmatpush2.msra.mxu0 0.0
  %1214 = vmatprep.subr.mxu0 0.0
  %1215 = vmatpush2.msra.mxu0 0.0
  %1216 = vmatprep.subr.mxu0 0.0
  %1217 = vmatpush2.msra.mxu0 0.0
  %1218 = vmatprep.subr.mxu0 0.0
  %1219 = vmatpush2.msra.mxu0 0.0
  %1220 = vmatprep.subr.mxu0 0.0
  %1221 = vmatpush2.msra.mxu0 0.0
  %1222 = vmatprep.subr.mxu0 0.0
  %1223 = vmatpush2.msra.mxu0 0.0
  %1224 = vmatprep.subr.mxu0 0.0
  %1225 = vmatpush2.msra.mxu0 0.0
  %1226 = vmatprep.subr.mxu0 0.0
  %1227 = vmatpush2.msra.mxu0 0.0
  %1228 = vmatprep.subr.mxu0 0.0
  %1229 = vmatpush2.msra.mxu0 0.0
  %1230 = vmatprep.subr.mxu0 0.0
  %1231 = vmatpush2.msra.mxu0 0.0
  %1232 = vmatprep.subr.mxu0 0.0
  %1233 = vmatpush2.msra.mxu0 0.0
  %1234 = vmatprep.subr.mxu0 0.0
  %1235 = vmatpush2.msra.mxu0 0.0
  %1236 = vmatprep.subr.mxu0 0.0
  %1237 = vmatpush2.msra.mxu0 0.0
  %1238 = vmatprep.mubr.f32.mxu0 0.0
  %1239 = vmatmul.mubr.f32.gmra.mxu0 %v1172
  %v1240 = vpop.f32.mrf.mxu0
  %v1241 = vadd.f32 0.0, %v1240
  %v1242 = vpop.f32.mrf.mxu0
  %1243 = vdwg.mxu0
  %v1245 = vsel %vm75, %v27, 0
  %1247 = vmatprep.subr.mxu0 0.0
  %1248 = vmatpush1.msra.mxu0 0.0
  %1249 = vmatprep.subr.mxu0 0.0
  %1250 = vmatpush1.msra.mxu0 0.0
  %1251 = vmatprep.subr.mxu0 0.0
  %1252 = vmatpush1.msra.mxu0 0.0
  %1253 = vmatprep.subr.mxu0 0.0
  %1254 = vmatpush1.msra.mxu0 0.0
  %1255 = vmatprep.subr.mxu0 0.0
  %1256 = vmatpush1.msra.mxu0 0.0
  %1257 = vmatprep.subr.mxu0 0.0
  %1258 = vmatpush1.msra.mxu0 0.0
  %1259 = vmatprep.subr.mxu0 0.0
  %1260 = vmatpush1.msra.mxu0 0.0
  %1261 = vmatprep.subr.mxu0 0.0
  %1262 = vmatpush1.msra.mxu0 0.0
  %1263 = vmatprep.subr.mxu0 0.0
  %1264 = vmatpush1.msra.mxu0 0.0
  %1265 = vmatprep.subr.mxu0 0.0
  %1266 = vmatpush1.msra.mxu0 0.0
  %1267 = vmatprep.subr.mxu0 0.0
  %1268 = vmatpush1.msra.mxu0 0.0
  %1269 = vmatprep.subr.mxu0 0.0
  %1270 = vmatpush1.msra.mxu0 0.0
  %1271 = vmatprep.subr.mxu0 0.0
  %1272 = vmatpush1.msra.mxu0 0.0
  %1273 = vmatprep.subr.mxu0 0.0
  %1274 = vmatpush1.msra.mxu0 0.0
  %1275 = vmatprep.subr.mxu0 0.0
  %1276 = vmatpush1.msra.mxu0 0.0
  %1277 = vmatprep.subr.mxu0 0.0
  %1278 = vmatpush1.msra.mxu0 %v59
  %1279 = vmatprep.subr.mxu0 0.0
  %1280 = vmatpush2.msra.mxu0 0.0
  %1281 = vmatprep.subr.mxu0 0.0
  %1282 = vmatpush2.msra.mxu0 0.0
  %1283 = vmatprep.subr.mxu0 0.0
  %1284 = vmatpush2.msra.mxu0 0.0
  %1285 = vmatprep.subr.mxu0 0.0
  %1286 = vmatpush2.msra.mxu0 0.0
  %1287 = vmatprep.subr.mxu0 0.0
  %1288 = vmatpush2.msra.mxu0 0.0
  %1289 = vmatprep.subr.mxu0 0.0
  %1290 = vmatpush2.msra.mxu0 0.0
  %1291 = vmatprep.subr.mxu0 0.0
  %1292 = vmatpush2.msra.mxu0 0.0
  %1293 = vmatprep.subr.mxu0 0.0
  %1294 = vmatpush2.msra.mxu0 0.0
  %1295 = vmatprep.subr.mxu0 0.0
  %1296 = vmatpush2.msra.mxu0 0.0
  %1297 = vmatprep.subr.mxu0 0.0
  %1298 = vmatpush2.msra.mxu0 0.0
  %1299 = vmatprep.subr.mxu0 0.0
  %1300 = vmatpush2.msra.mxu0 0.0
  %1301 = vmatprep.subr.mxu0 0.0
  %1302 = vmatpush2.msra.mxu0 0.0
  %1303 = vmatprep.subr.mxu0 0.0
  %1304 = vmatpush2.msra.mxu0 0.0
  %1305 = vmatprep.subr.mxu0 0.0
  %1306 = vmatpush2.msra.mxu0 0.0
  %1307 = vmatprep.subr.mxu0 0.0
  %1308 = vmatpush2.msra.mxu0 0.0
  %1309 = vmatprep.subr.mxu0 0.0
  %1310 = vmatpush2.msra.mxu0 0.0
  %1311 = vmatprep.mubr.f32.mxu0 0.0
  %1312 = vmatmul.mubr.f32.gmra.mxu0 %v1245
  %v1313 = vpop.f32.mrf.mxu0
  %v1314 = vadd.f32 0.0, %v1313
  %v1315 = vpop.f32.mrf.mxu0
  %1316 = vdwg.mxu0
  %v1318 = vsel %vm75, %v28, 0
  %1320 = vmatprep.subr.mxu0 0.0
  %1321 = vmatpush1.msra.mxu0 0.0
  %1322 = vmatprep.subr.mxu0 0.0
  %1323 = vmatpush1.msra.mxu0 0.0
  %1324 = vmatprep.subr.mxu0 0.0
  %1325 = vmatpush1.msra.mxu0 0.0
  %1326 = vmatprep.subr.mxu0 0.0
  %1327 = vmatpush1.msra.mxu0 0.0
  %1328 = vmatprep.subr.mxu0 0.0
  %1329 = vmatpush1.msra.mxu0 0.0
  %1330 = vmatprep.subr.mxu0 0.0
  %1331 = vmatpush1.msra.mxu0 0.0
  %1332 = vmatprep.subr.mxu0 0.0
  %1333 = vmatpush1.msra.mxu0 0.0
  %1334 = vmatprep.subr.mxu0 0.0
  %1335 = vmatpush1.msra.mxu0 0.0
  %1336 = vmatprep.subr.mxu0 0.0
  %1337 = vmatpush1.msra.mxu0 0.0
  %1338 = vmatprep.subr.mxu0 0.0
  %1339 = vmatpush1.msra.mxu0 0.0
  %1340 = vmatprep.subr.mxu0 0.0
  %1341 = vmatpush1.msra.mxu0 0.0
  %1342 = vmatprep.subr.mxu0 0.0
  %1343 = vmatpush1.msra.mxu0 0.0
  %1344 = vmatprep.subr.mxu0 0.0
  %1345 = vmatpush1.msra.mxu0 0.0
  %1346 = vmatprep.subr.mxu0 0.0
  %1347 = vmatpush1.msra.mxu0 0.0
  %1348 = vmatprep.subr.mxu0 0.0
  %1349 = vmatpush1.msra.mxu0 0.0
  %1350 = vmatprep.subr.mxu0 0.0
  %1351 = vmatpush1.msra.mxu0 %v60
  %1352 = vmatprep.subr.mxu0 0.0
  %1353 = vmatpush2.msra.mxu0 0.0
  %1354 = vmatprep.subr.mxu0 0.0
  %1355 = vmatpush2.msra.mxu0 0.0
  %1356 = vmatprep.subr.mxu0 0.0
  %1357 = vmatpush2.msra.mxu0 0.0
  %1358 = vmatprep.subr.mxu0 0.0
  %1359 = vmatpush2.msra.mxu0 0.0
  %1360 = vmatprep.subr.mxu0 0.0
  %1361 = vmatpush2.msra.mxu0 0.0
  %1362 = vmatprep.subr.mxu0 0.0
  %1363 = vmatpush2.msra.mxu0 0.0
  %1364 = vmatprep.subr.mxu0 0.0
  %1365 = vmatpush2.msra.mxu0 0.0
  %1366 = vmatprep.subr.mxu0 0.0
  %1367 = vmatpush2.msra.mxu0 0.0
  %1368 = vmatprep.subr.mxu0 0.0
  %1369 = vmatpush2.msra.mxu0 0.0
  %1370 = vmatprep.subr.mxu0 0.0
  %1371 = vmatpush2.msra.mxu0 0.0
  %1372 = vmatprep.subr.mxu0 0.0
  %1373 = vmatpush2.msra.mxu0 0.0
  %1374 = vmatprep.subr.mxu0 0.0
  %1375 = vmatpush2.msra.mxu0 0.0
  %1376 = vmatprep.subr.mxu0 0.0
  %1377 = vmatpush2.msra.mxu0 0.0
  %1378 = vmatprep.subr.mxu0 0.0
  %1379 = vmatpush2.msra.mxu0 0.0
  %1380 = vmatprep.subr.mxu0 0.0
  %1381 = vmatpush2.msra.mxu0 0.0
  %1382 = vmatprep.subr.mxu0 0.0
  %1383 = vmatpush2.msra.mxu0 0.0
  %1384 = vmatprep.mubr.f32.mxu0 0.0
  %1385 = vmatmul.mubr.f32.gmra.mxu0 %v1318
  %v1386 = vpop.f32.mrf.mxu0
  %v1387 = vadd.f32 0.0, %v1386
  %v1388 = vpop.f32.mrf.mxu0
  %1389 = vdwg.mxu0
  %v1391 = vsel %vm75, %v29, 0
  %1393 = vmatprep.subr.mxu0 0.0
  %1394 = vmatpush1.msra.mxu0 0.0
  %1395 = vmatprep.subr.mxu0 0.0
  %1396 = vmatpush1.msra.mxu0 0.0
  %1397 = vmatprep.subr.mxu0 0.0
  %1398 = vmatpush1.msra.mxu0 0.0
  %1399 = vmatprep.subr.mxu0 0.0
  %1400 = vmatpush1.msra.mxu0 0.0
  %1401 = vmatprep.subr.mxu0 0.0
  %1402 = vmatpush1.msra.mxu0 0.0
  %1403 = vmatprep.subr.mxu0 0.0
  %1404 = vmatpush1.msra.mxu0 0.0
  %1405 = vmatprep.subr.mxu0 0.0
  %1406 = vmatpush1.msra.mxu0 0.0
  %1407 = vmatprep.subr.mxu0 0.0
  %1408 = vmatpush1.msra.mxu0 0.0
  %1409 = vmatprep.subr.mxu0 0.0
  %1410 = vmatpush1.msra.mxu0 0.0
  %1411 = vmatprep.subr.mxu0 0.0
  %1412 = vmatpush1.msra.mxu0 0.0
  %1413 = vmatprep.subr.mxu0 0.0
  %1414 = vmatpush1.msra.mxu0 0.0
  %1415 = vmatprep.subr.mxu0 0.0
  %1416 = vmatpush1.msra.mxu0 0.0
  %1417 = vmatprep.subr.mxu0 0.0
  %1418 = vmatpush1.msra.mxu0 0.0
  %1419 = vmatprep.subr.mxu0 0.0
  %1420 = vmatpush1.msra.mxu0 0.0
  %1421 = vmatprep.subr.mxu0 0.0
  %1422 = vmatpush1.msra.mxu0 0.0
  %1423 = vmatprep.subr.mxu0 0.0
  %1424 = vmatpush1.msra.mxu0 %v61
  %1425 = vmatprep.subr.mxu0 0.0
  %1426 = vmatpush2.msra.mxu0 0.0
  %1427 = vmatprep.subr.mxu0 0.0
  %1428 = vmatpush2.msra.mxu0 0.0
  %1429 = vmatprep.subr.mxu0 0.0
  %1430 = vmatpush2.msra.mxu0 0.0
  %1431 = vmatprep.subr.mxu0 0.0
  %1432 = vmatpush2.msra.mxu0 0.0
  %1433 = vmatprep.subr.mxu0 0.0
  %1434 = vmatpush2.msra.mxu0 0.0
  %1435 = vmatprep.subr.mxu0 0.0
  %1436 = vmatpush2.msra.mxu0 0.0
  %1437 = vmatprep.subr.mxu0 0.0
  %1438 = vmatpush2.msra.mxu0 0.0
  %1439 = vmatprep.subr.mxu0 0.0
  %1440 = vmatpush2.msra.mxu0 0.0
  %1441 = vmatprep.subr.mxu0 0.0
  %1442 = vmatpush2.msra.mxu0 0.0
  %1443 = vmatprep.subr.mxu0 0.0
  %1444 = vmatpush2.msra.mxu0 0.0
  %1445 = vmatprep.subr.mxu0 0.0
  %1446 = vmatpush2.msra.mxu0 0.0
  %1447 = vmatprep.subr.mxu0 0.0
  %1448 = vmatpush2.msra.mxu0 0.0
  %1449 = vmatprep.subr.mxu0 0.0
  %1450 = vmatpush2.msra.mxu0 0.0
  %1451 = vmatprep.subr.mxu0 0.0
  %1452 = vmatpush2.msra.mxu0 0.0
  %1453 = vmatprep.subr.mxu0 0.0
  %1454 = vmatpush2.msra.mxu0 0.0
  %1455 = vmatprep.subr.mxu0 0.0
  %1456 = vmatpush2.msra.mxu0 0.0
  %1457 = vmatprep.mubr.f32.mxu0 0.0
  %1458 = vmatmul.mubr.f32.gmra.mxu0 %v1391
  %v1459 = vpop.f32.mrf.mxu0
  %v1460 = vadd.f32 0.0, %v1459
  %v1461 = vpop.f32.mrf.mxu0
  %1462 = vdwg.mxu0
  %v1464 = vsel %vm75, %v30, 0
  %1466 = vmatprep.subr.mxu0 0.0
  %1467 = vmatpush1.msra.mxu0 0.0
  %1468 = vmatprep.subr.mxu0 0.0
  %1469 = vmatpush1.msra.mxu0 0.0
  %1470 = vmatprep.subr.mxu0 0.0
  %1471 = vmatpush1.msra.mxu0 0.0
  %1472 = vmatprep.subr.mxu0 0.0
  %1473 = vmatpush1.msra.mxu0 0.0
  %1474 = vmatprep.subr.mxu0 0.0
  %1475 = vmatpush1.msra.mxu0 0.0
  %1476 = vmatprep.subr.mxu0 0.0
  %1477 = vmatpush1.msra.mxu0 0.0
  %1478 = vmatprep.subr.mxu0 0.0
  %1479 = vmatpush1.msra.mxu0 0.0
  %1480 = vmatprep.subr.mxu0 0.0
  %1481 = vmatpush1.msra.mxu0 0.0
  %1482 = vmatprep.subr.mxu0 0.0
  %1483 = vmatpush1.msra.mxu0 0.0
  %1484 = vmatprep.subr.mxu0 0.0
  %1485 = vmatpush1.msra.mxu0 0.0
  %1486 = vmatprep.subr.mxu0 0.0
  %1487 = vmatpush1.msra.mxu0 0.0
  %1488 = vmatprep.subr.mxu0 0.0
  %1489 = vmatpush1.msra.mxu0 0.0
  %1490 = vmatprep.subr.mxu0 0.0
  %1491 = vmatpush1.msra.mxu0 0.0
  %1492 = vmatprep.subr.mxu0 0.0
  %1493 = vmatpush1.msra.mxu0 0.0
  %1494 = vmatprep.subr.mxu0 0.0
  %1495 = vmatpush1.msra.mxu0 0.0
  %1496 = vmatprep.subr.mxu0 0.0
  %1497 = vmatpush1.msra.mxu0 %v62
  %1498 = vmatprep.subr.mxu0 0.0
  %1499 = vmatpush2.msra.mxu0 0.0
  %1500 = vmatprep.subr.mxu0 0.0
  %1501 = vmatpush2.msra.mxu0 0.0
  %1502 = vmatprep.subr.mxu0 0.0
  %1503 = vmatpush2.msra.mxu0 0.0
  %1504 = vmatprep.subr.mxu0 0.0
  %1505 = vmatpush2.msra.mxu0 0.0
  %1506 = vmatprep.subr.mxu0 0.0
  %1507 = vmatpush2.msra.mxu0 0.0
  %1508 = vmatprep.subr.mxu0 0.0
  %1509 = vmatpush2.msra.mxu0 0.0
  %1510 = vmatprep.subr.mxu0 0.0
  %1511 = vmatpush2.msra.mxu0 0.0
  %1512 = vmatprep.subr.mxu0 0.0
  %1513 = vmatpush2.msra.mxu0 0.0
  %1514 = vmatprep.subr.mxu0 0.0
  %1515 = vmatpush2.msra.mxu0 0.0
  %1516 = vmatprep.subr.mxu0 0.0
  %1517 = vmatpush2.msra.mxu0 0.0
  %1518 = vmatprep.subr.mxu0 0.0
  %1519 = vmatpush2.msra.mxu0 0.0
  %1520 = vmatprep.subr.mxu0 0.0
  %1521 = vmatpush2.msra.mxu0 0.0
  %1522 = vmatprep.subr.mxu0 0.0
  %1523 = vmatpush2.msra.mxu0 0.0
  %1524 = vmatprep.subr.mxu0 0.0
  %1525 = vmatpush2.msra.mxu0 0.0
  %1526 = vmatprep.subr.mxu0 0.0
  %1527 = vmatpush2.msra.mxu0 0.0
  %1528 = vmatprep.subr.mxu0 0.0
  %1529 = vmatpush2.msra.mxu0 0.0
  %1530 = vmatprep.mubr.f32.mxu0 0.0
  %1531 = vmatmul.mubr.f32.gmra.mxu0 %v1464
  %v1532 = vpop.f32.mrf.mxu0
  %v1533 = vadd.f32 0.0, %v1532
  %v1534 = vpop.f32.mrf.mxu0
  %1535 = vdwg.mxu0
  %v1537 = vsel %vm75, %v31, 0
  %1539 = vmatprep.subr.mxu0 0.0
  %1540 = vmatpush1.msra.mxu0 0.0
  %1541 = vmatprep.subr.mxu0 0.0
  %1542 = vmatpush1.msra.mxu0 0.0
  %1543 = vmatprep.subr.mxu0 0.0
  %1544 = vmatpush1.msra.mxu0 0.0
  %1545 = vmatprep.subr.mxu0 0.0
  %1546 = vmatpush1.msra.mxu0 0.0
  %1547 = vmatprep.subr.mxu0 0.0
  %1548 = vmatpush1.msra.mxu0 0.0
  %1549 = vmatprep.subr.mxu0 0.0
  %1550 = vmatpush1.msra.mxu0 0.0
  %1551 = vmatprep.subr.mxu0 0.0
  %1552 = vmatpush1.msra.mxu0 0.0
  %1553 = vmatprep.subr.mxu0 0.0
  %1554 = vmatpush1.msra.mxu0 0.0
  %1555 = vmatprep.subr.mxu0 0.0
  %1556 = vmatpush1.msra.mxu0 0.0
  %1557 = vmatprep.subr.mxu0 0.0
  %1558 = vmatpush1.msra.mxu0 0.0
  %1559 = vmatprep.subr.mxu0 0.0
  %1560 = vmatpush1.msra.mxu0 0.0
  %1561 = vmatprep.subr.mxu0 0.0
  %1562 = vmatpush1.msra.mxu0 0.0
  %1563 = vmatprep.subr.mxu0 0.0
  %1564 = vmatpush1.msra.mxu0 0.0
  %1565 = vmatprep.subr.mxu0 0.0
  %1566 = vmatpush1.msra.mxu0 0.0
  %1567 = vmatprep.subr.mxu0 0.0
  %1568 = vmatpush1.msra.mxu0 0.0
  %1569 = vmatprep.subr.mxu0 0.0
  %1570 = vmatpush1.msra.mxu0 %v63
  %1571 = vmatprep.subr.mxu0 0.0
  %1572 = vmatpush2.msra.mxu0 0.0
  %1573 = vmatprep.subr.mxu0 0.0
  %1574 = vmatpush2.msra.mxu0 0.0
  %1575 = vmatprep.subr.mxu0 0.0
  %1576 = vmatpush2.msra.mxu0 0.0
  %1577 = vmatprep.subr.mxu0 0.0
  %1578 = vmatpush2.msra.mxu0 0.0
  %1579 = vmatprep.subr.mxu0 0.0
  %1580 = vmatpush2.msra.mxu0 0.0
  %1581 = vmatprep.subr.mxu0 0.0
  %1582 = vmatpush2.msra.mxu0 0.0
  %1583 = vmatprep.subr.mxu0 0.0
  %1584 = vmatpush2.msra.mxu0 0.0
  %1585 = vmatprep.subr.mxu0 0.0
  %1586 = vmatpush2.msra.mxu0 0.0
  %1587 = vmatprep.subr.mxu0 0.0
  %1588 = vmatpush2.msra.mxu0 0.0
  %1589 = vmatprep.subr.mxu0 0.0
  %1590 = vmatpush2.msra.mxu0 0.0
  %1591 = vmatprep.subr.mxu0 0.0
  %1592 = vmatpush2.msra.mxu0 0.0
  %1593 = vmatprep.subr.mxu0 0.0
  %1594 = vmatpush2.msra.mxu0 0.0
  %1595 = vmatprep.subr.mxu0 0.0
  %1596 = vmatpush2.msra.mxu0 0.0
  %1597 = vmatprep.subr.mxu0 0.0
  %1598 = vmatpush2.msra.mxu0 0.0
  %1599 = vmatprep.subr.mxu0 0.0
  %1600 = vmatpush2.msra.mxu0 0.0
  %1601 = vmatprep.subr.mxu0 0.0
  %1602 = vmatpush2.msra.mxu0 0.0
  %1603 = vmatprep.mubr.f32.mxu0 0.0
  %1604 = vmatmul.mubr.f32.gmra.mxu0 %v1537
  %v1605 = vpop.f32.mrf.mxu0
  %v1606 = vadd.f32 0.0, %v1605
  %v1607 = vpop.f32.mrf.mxu0
  %1608 = vdwg.mxu0
  %v1610 = vsel %vm75, %v32, 0
  %1612 = vmatprep.subr.mxu0 0.0
  %1613 = vmatpush1.msra.mxu0 0.0
  %1614 = vmatprep.subr.mxu0 0.0
  %1615 = vmatpush1.msra.mxu0 0.0
  %1616 = vmatprep.subr.mxu0 0.0
  %1617 = vmatpush1.msra.mxu0 0.0
  %1618 = vmatprep.subr.mxu0 0.0
  %1619 = vmatpush1.msra.mxu0 0.0
  %1620 = vmatprep.subr.mxu0 0.0
  %1621 = vmatpush1.msra.mxu0 0.0
  %1622 = vmatprep.subr.mxu0 0.0
  %1623 = vmatpush1.msra.mxu0 0.0
  %1624 = vmatprep.subr.mxu0 0.0
  %1625 = vmatpush1.msra.mxu0 0.0
  %1626 = vmatprep.subr.mxu0 0.0
  %1627 = vmatpush1.msra.mxu0 0.0
  %1628 = vmatprep.subr.mxu0 0.0
  %1629 = vmatpush1.msra.mxu0 0.0
  %1630 = vmatprep.subr.mxu0 0.0
  %1631 = vmatpush1.msra.mxu0 0.0
  %1632 = vmatprep.subr.mxu0 0.0
  %1633 = vmatpush1.msra.mxu0 0.0
  %1634 = vmatprep.subr.mxu0 0.0
  %1635 = vmatpush1.msra.mxu0 0.0
  %1636 = vmatprep.subr.mxu0 0.0
  %1637 = vmatpush1.msra.mxu0 0.0
  %1638 = vmatprep.subr.mxu0 0.0
  %1639 = vmatpush1.msra.mxu0 0.0
  %1640 = vmatprep.subr.mxu0 0.0
  %1641 = vmatpush1.msra.mxu0 0.0
  %1642 = vmatprep.subr.mxu0 0.0
  %1643 = vmatpush1.msra.mxu0 %v64
  %1644 = vmatprep.subr.mxu0 0.0
  %1645 = vmatpush2.msra.mxu0 0.0
  %1646 = vmatprep.subr.mxu0 0.0
  %1647 = vmatpush2.msra.mxu0 0.0
  %1648 = vmatprep.subr.mxu0 0.0
  %1649 = vmatpush2.msra.mxu0 0.0
  %1650 = vmatprep.subr.mxu0 0.0
  %1651 = vmatpush2.msra.mxu0 0.0
  %1652 = vmatprep.subr.mxu0 0.0
  %1653 = vmatpush2.msra.mxu0 0.0
  %1654 = vmatprep.subr.mxu0 0.0
  %1655 = vmatpush2.msra.mxu0 0.0
  %1656 = vmatprep.subr.mxu0 0.0
  %1657 = vmatpush2.msra.mxu0 0.0
  %1658 = vmatprep.subr.mxu0 0.0
  %1659 = vmatpush2.msra.mxu0 0.0
  %1660 = vmatprep.subr.mxu0 0.0
  %1661 = vmatpush2.msra.mxu0 0.0
  %1662 = vmatprep.subr.mxu0 0.0
  %1663 = vmatpush2.msra.mxu0 0.0
  %1664 = vmatprep.subr.mxu0 0.0
  %1665 = vmatpush2.msra.mxu0 0.0
  %1666 = vmatprep.subr.mxu0 0.0
  %1667 = vmatpush2.msra.mxu0 0.0
  %1668 = vmatprep.subr.mxu0 0.0
  %1669 = vmatpush2.msra.mxu0 0.0
  %1670 = vmatprep.subr.mxu0 0.0
  %1671 = vmatpush2.msra.mxu0 0.0
  %1672 = vmatprep.subr.mxu0 0.0
  %1673 = vmatpush2.msra.mxu0 0.0
  %1674 = vmatprep.subr.mxu0 0.0
  %1675 = vmatpush2.msra.mxu0 0.0
  %1676 = vmatprep.mubr.f32.mxu0 0.0
  %1677 = vmatmul.mubr.f32.gmra.mxu0 %v1610
  %v1678 = vpop.f32.mrf.mxu0
  %v1679 = vadd.f32 0.0, %v1678
  %v1680 = vpop.f32.mrf.mxu0
  %1681 = vdwg.mxu0
  %v1683 = vsel %vm75, %v33, 0
  %1685 = vmatprep.subr.mxu0 0.0
  %1686 = vmatpush1.msra.mxu0 0.0
  %1687 = vmatprep.subr.mxu0 0.0
  %1688 = vmatpush1.msra.mxu0 0.0
  %1689 = vmatprep.subr.mxu0 0.0
  %1690 = vmatpush1.msra.mxu0 0.0
  %1691 = vmatprep.subr.mxu0 0.0
  %1692 = vmatpush1.msra.mxu0 0.0
  %1693 = vmatprep.subr.mxu0 0.0
  %1694 = vmatpush1.msra.mxu0 0.0
  %1695 = vmatprep.subr.mxu0 0.0
  %1696 = vmatpush1.msra.mxu0 0.0
  %1697 = vmatprep.subr.mxu0 0.0
  %1698 = vmatpush1.msra.mxu0 0.0
  %1699 = vmatprep.subr.mxu0 0.0
  %1700 = vmatpush1.msra.mxu0 0.0
  %1701 = vmatprep.subr.mxu0 0.0
  %1702 = vmatpush1.msra.mxu0 0.0
  %1703 = vmatprep.subr.mxu0 0.0
  %1704 = vmatpush1.msra.mxu0 0.0
  %1705 = vmatprep.subr.mxu0 0.0
  %1706 = vmatpush1.msra.mxu0 0.0
  %1707 = vmatprep.subr.mxu0 0.0
  %1708 = vmatpush1.msra.mxu0 0.0
  %1709 = vmatprep.subr.mxu0 0.0
  %1710 = vmatpush1.msra.mxu0 0.0
  %1711 = vmatprep.subr.mxu0 0.0
  %1712 = vmatpush1.msra.mxu0 0.0
  %1713 = vmatprep.subr.mxu0 0.0
  %1714 = vmatpush1.msra.mxu0 0.0
  %1715 = vmatprep.subr.mxu0 0.0
  %1716 = vmatpush1.msra.mxu0 %v65
  %1717 = vmatprep.subr.mxu0 0.0
  %1718 = vmatpush2.msra.mxu0 0.0
  %1719 = vmatprep.subr.mxu0 0.0
  %1720 = vmatpush2.msra.mxu0 0.0
  %1721 = vmatprep.subr.mxu0 0.0
  %1722 = vmatpush2.msra.mxu0 0.0
  %1723 = vmatprep.subr.mxu0 0.0
  %1724 = vmatpush2.msra.mxu0 0.0
  %1725 = vmatprep.subr.mxu0 0.0
  %1726 = vmatpush2.msra.mxu0 0.0
  %1727 = vmatprep.subr.mxu0 0.0
  %1728 = vmatpush2.msra.mxu0 0.0
  %1729 = vmatprep.subr.mxu0 0.0
  %1730 = vmatpush2.msra.mxu0 0.0
  %1731 = vmatprep.subr.mxu0 0.0
  %1732 = vmatpush2.msra.mxu0 0.0
  %1733 = vmatprep.subr.mxu0 0.0
  %1734 = vmatpush2.msra.mxu0 0.0
  %1735 = vmatprep.subr.mxu0 0.0
  %1736 = vmatpush2.msra.mxu0 0.0
  %1737 = vmatprep.subr.mxu0 0.0
  %1738 = vmatpush2.msra.mxu0 0.0
  %1739 = vmatprep.subr.mxu0 0.0
  %1740 = vmatpush2.msra.mxu0 0.0
  %1741 = vmatprep.subr.mxu0 0.0
  %1742 = vmatpush2.msra.mxu0 0.0
  %1743 = vmatprep.subr.mxu0 0.0
  %1744 = vmatpush2.msra.mxu0 0.0
  %1745 = vmatprep.subr.mxu0 0.0
  %1746 = vmatpush2.msra.mxu0 0.0
  %1747 = vmatprep.subr.mxu0 0.0
  %1748 = vmatpush2.msra.mxu0 0.0
  %1749 = vmatprep.mubr.f32.mxu0 0.0
  %1750 = vmatmul.mubr.f32.gmra.mxu0 %v1683
  %v1751 = vpop.f32.mrf.mxu0
  %v1752 = vadd.f32 0.0, %v1751
  %v1753 = vpop.f32.mrf.mxu0
  %1754 = vdwg.mxu0
  %v1756 = vsel %vm75, %v34, 0
  %1758 = vmatprep.subr.mxu0 0.0
  %1759 = vmatpush1.msra.mxu0 0.0
  %1760 = vmatprep.subr.mxu0 0.0
  %1761 = vmatpush1.msra.mxu0 0.0
  %1762 = vmatprep.subr.mxu0 0.0
  %1763 = vmatpush1.msra.mxu0 0.0
  %1764 = vmatprep.subr.mxu0 0.0
  %1765 = vmatpush1.msra.mxu0 0.0
  %1766 = vmatprep.subr.mxu0 0.0
  %1767 = vmatpush1.msra.mxu0 0.0
  %1768 = vmatprep.subr.mxu0 0.0
  %1769 = vmatpush1.msra.mxu0 0.0
  %1770 = vmatprep.subr.mxu0 0.0
  %1771 = vmatpush1.msra.mxu0 0.0
  %1772 = vmatprep.subr.mxu0 0.0
  %1773 = vmatpush1.msra.mxu0 0.0
  %1774 = vmatprep.subr.mxu0 0.0
  %1775 = vmatpush1.msra.mxu0 0.0
  %1776 = vmatprep.subr.mxu0 0.0
  %1777 = vmatpush1.msra.mxu0 0.0
  %1778 = vmatprep.subr.mxu0 0.0
  %1779 = vmatpush1.msra.mxu0 0.0
  %1780 = vmatprep.subr.mxu0 0.0
  %1781 = vmatpush1.msra.mxu0 0.0
  %1782 = vmatprep.subr.mxu0 0.0
  %1783 = vmatpush1.msra.mxu0 0.0
  %1784 = vmatprep.subr.mxu0 0.0
  %1785 = vmatpush1.msra.mxu0 0.0
  %1786 = vmatprep.subr.mxu0 0.0
  %1787 = vmatpush1.msra.mxu0 0.0
  %1788 = vmatprep.subr.mxu0 0.0
  %1789 = vmatpush1.msra.mxu0 %v66
  %1790 = vmatprep.subr.mxu0 0.0
  %1791 = vmatpush2.msra.mxu0 0.0
  %1792 = vmatprep.subr.mxu0 0.0
  %1793 = vmatpush2.msra.mxu0 0.0
  %1794 = vmatprep.subr.mxu0 0.0
  %1795 = vmatpush2.msra.mxu0 0.0
  %1796 = vmatprep.subr.mxu0 0.0
  %1797 = vmatpush2.msra.mxu0 0.0
  %1798 = vmatprep.subr.mxu0 0.0
  %1799 = vmatpush2.msra.mxu0 0.0
  %1800 = vmatprep.subr.mxu0 0.0
  %1801 = vmatpush2.msra.mxu0 0.0
  %1802 = vmatprep.subr.mxu0 0.0
  %1803 = vmatpush2.msra.mxu0 0.0
  %1804 = vmatprep.subr.mxu0 0.0
  %1805 = vmatpush2.msra.mxu0 0.0
  %1806 = vmatprep.subr.mxu0 0.0
  %1807 = vmatpush2.msra.mxu0 0.0
  %1808 = vmatprep.subr.mxu0 0.0
  %1809 = vmatpush2.msra.mxu0 0.0
  %1810 = vmatprep.subr.mxu0 0.0
  %1811 = vmatpush2.msra.mxu0 0.0
  %1812 = vmatprep.subr.mxu0 0.0
  %1813 = vmatpush2.msra.mxu0 0.0
  %1814 = vmatprep.subr.mxu0 0.0
  %1815 = vmatpush2.msra.mxu0 0.0
  %1816 = vmatprep.subr.mxu0 0.0
  %1817 = vmatpush2.msra.mxu0 0.0
  %1818 = vmatprep.subr.mxu0 0.0
  %1819 = vmatpush2.msra.mxu0 0.0
  %1820 = vmatprep.subr.mxu0 0.0
  %1821 = vmatpush2.msra.mxu0 0.0
  %1822 = vmatprep.mubr.f32.mxu0 0.0
  %1823 = vmatmul.mubr.f32.gmra.mxu0 %v1756
  %v1824 = vpop.f32.mrf.mxu0
  %v1825 = vadd.f32 0.0, %v1824
  %v1826 = vpop.f32.mrf.mxu0
  %1827 = vdwg.mxu0
  %v1829 = vsel %vm75, %v35, 0
  %1831 = vmatprep.subr.mxu0 0.0
  %1832 = vmatpush1.msra.mxu0 0.0
  %1833 = vmatprep.subr.mxu0 0.0
  %1834 = vmatpush1.msra.mxu0 0.0
  %1835 = vmatprep.subr.mxu0 0.0
  %1836 = vmatpush1.msra.mxu0 0.0
  %1837 = vmatprep.subr.mxu0 0.0
  %1838 = vmatpush1.msra.mxu0 0.0
  %1839 = vmatprep.subr.mxu0 0.0
  %1840 = vmatpush1.msra.mxu0 0.0
  %1841 = vmatprep.subr.mxu0 0.0
  %1842 = vmatpush1.msra.mxu0 0.0
  %1843 = vmatprep.subr.mxu0 0.0
  %1844 = vmatpush1.msra.mxu0 0.0
  %1845 = vmatprep.subr.mxu0 0.0
  %1846 = vmatpush1.msra.mxu0 0.0
  %1847 = vmatprep.subr.mxu0 0.0
  %1848 = vmatpush1.msra.mxu0 0.0
  %1849 = vmatprep.subr.mxu0 0.0
  %1850 = vmatpush1.msra.mxu0 0.0
  %1851 = vmatprep.subr.mxu0 0.0
  %1852 = vmatpush1.msra.mxu0 0.0
  %1853 = vmatprep.subr.mxu0 0.0
  %1854 = vmatpush1.msra.mxu0 0.0
  %1855 = vmatprep.subr.mxu0 0.0
  %1856 = vmatpush1.msra.mxu0 0.0
  %1857 = vmatprep.subr.mxu0 0.0
  %1858 = vmatpush1.msra.mxu0 0.0
  %1859 = vmatprep.subr.mxu0 0.0
  %1860 = vmatpush1.msra.mxu0 0.0
  %1861 = vmatprep.subr.mxu0 0.0
  %1862 = vmatpush1.msra.mxu0 %v67
  %1863 = vmatprep.subr.mxu0 0.0
  %1864 = vmatpush2.msra.mxu0 0.0
  %1865 = vmatprep.subr.mxu0 0.0
  %1866 = vmatpush2.msra.mxu0 0.0
  %1867 = vmatprep.subr.mxu0 0.0
  %1868 = vmatpush2.msra.mxu0 0.0
  %1869 = vmatprep.subr.mxu0 0.0
  %1870 = vmatpush2.msra.mxu0 0.0
  %1871 = vmatprep.subr.mxu0 0.0
  %1872 = vmatpush2.msra.mxu0 0.0
  %1873 = vmatprep.subr.mxu0 0.0
  %1874 = vmatpush2.msra.mxu0 0.0
  %1875 = vmatprep.subr.mxu0 0.0
  %1876 = vmatpush2.msra.mxu0 0.0
  %1877 = vmatprep.subr.mxu0 0.0
  %1878 = vmatpush2.msra.mxu0 0.0
  %1879 = vmatprep.subr.mxu0 0.0
  %1880 = vmatpush2.msra.mxu0 0.0
  %1881 = vmatprep.subr.mxu0 0.0
  %1882 = vmatpush2.msra.mxu0 0.0
  %1883 = vmatprep.subr.mxu0 0.0
  %1884 = vmatpush2.msra.mxu0 0.0
  %1885 = vmatprep.subr.mxu0 0.0
  %1886 = vmatpush2.msra.mxu0 0.0
  %1887 = vmatprep.subr.mxu0 0.0
  %1888 = vmatpush2.msra.mxu0 0.0
  %1889 = vmatprep.subr.mxu0 0.0
  %1890 = vmatpush2.msra.mxu0 0.0
  %1891 = vmatprep.subr.mxu0 0.0
  %1892 = vmatpush2.msra.mxu0 0.0
  %1893 = vmatprep.subr.mxu0 0.0
  %1894 = vmatpush2.msra.mxu0 0.0
  %1895 = vmatprep.mubr.f32.mxu0 0.0
  %1896 = vmatmul.mubr.f32.gmra.mxu0 %v1829
  %v1897 = vpop.f32.mrf.mxu0
  %v1898 = vadd.f32 0.0, %v1897
  %v1899 = vpop.f32.mrf.mxu0
  %1900 = vdwg.mxu0
  %v1902 = vsel %vm75, %v36, 0
  %1904 = vmatprep.subr.mxu0 0.0
  %1905 = vmatpush1.msra.mxu0 0.0
  %1906 = vmatprep.subr.mxu0 0.0
  %1907 = vmatpush1.msra.mxu0 0.0
  %1908 = vmatprep.subr.mxu0 0.0
  %1909 = vmatpush1.msra.mxu0 0.0
  %1910 = vmatprep.subr.mxu0 0.0
  %1911 = vmatpush1.msra.mxu0 0.0
  %1912 = vmatprep.subr.mxu0 0.0
  %1913 = vmatpush1.msra.mxu0 0.0
  %1914 = vmatprep.subr.mxu0 0.0
  %1915 = vmatpush1.msra.mxu0 0.0
  %1916 = vmatprep.subr.mxu0 0.0
  %1917 = vmatpush1.msra.mxu0 0.0
  %1918 = vmatprep.subr.mxu0 0.0
  %1919 = vmatpush1.msra.mxu0 0.0
  %1920 = vmatprep.subr.mxu0 0.0
  %1921 = vmatpush1.msra.mxu0 0.0
  %1922 = vmatprep.subr.mxu0 0.0
  %1923 = vmatpush1.msra.mxu0 0.0
  %1924 = vmatprep.subr.mxu0 0.0
  %1925 = vmatpush1.msra.mxu0 0.0
  %1926 = vmatprep.subr.mxu0 0.0
  %1927 = vmatpush1.msra.mxu0 0.0
  %1928 = vmatprep.subr.mxu0 0.0
  %1929 = vmatpush1.msra.mxu0 0.0
  %1930 = vmatprep.subr.mxu0 0.0
  %1931 = vmatpush1.msra.mxu0 0.0
  %1932 = vmatprep.subr.mxu0 0.0
  %1933 = vmatpush1.msra.mxu0 0.0
  %1934 = vmatprep.subr.mxu0 0.0
  %1935 = vmatpush1.msra.mxu0 %v68
  %1936 = vmatprep.subr.mxu0 0.0
  %1937 = vmatpush2.msra.mxu0 0.0
  %1938 = vmatprep.subr.mxu0 0.0
  %1939 = vmatpush2.msra.mxu0 0.0
  %1940 = vmatprep.subr.mxu0 0.0
  %1941 = vmatpush2.msra.mxu0 0.0
  %1942 = vmatprep.subr.mxu0 0.0
  %1943 = vmatpush2.msra.mxu0 0.0
  %1944 = vmatprep.subr.mxu0 0.0
  %1945 = vmatpush2.msra.mxu0 0.0
  %1946 = vmatprep.subr.mxu0 0.0
  %1947 = vmatpush2.msra.mxu0 0.0
  %1948 = vmatprep.subr.mxu0 0.0
  %1949 = vmatpush2.msra.mxu0 0.0
  %1950 = vmatprep.subr.mxu0 0.0
  %1951 = vmatpush2.msra.mxu0 0.0
  %1952 = vmatprep.subr.mxu0 0.0
  %1953 = vmatpush2.msra.mxu0 0.0
  %1954 = vmatprep.subr.mxu0 0.0
  %1955 = vmatpush2.msra.mxu0 0.0
  %1956 = vmatprep.subr.mxu0 0.0
  %1957 = vmatpush2.msra.mxu0 0.0
  %1958 = vmatprep.subr.mxu0 0.0
  %1959 = vmatpush2.msra.mxu0 0.0
  %1960 = vmatprep.subr.mxu0 0.0
  %1961 = vmatpush2.msra.mxu0 0.0
  %1962 = vmatprep.subr.mxu0 0.0
  %1963 = vmatpush2.msra.mxu0 0.0
  %1964 = vmatprep.subr.mxu0 0.0
  %1965 = vmatpush2.msra.mxu0 0.0
  %1966 = vmatprep.subr.mxu0 0.0
  %1967 = vmatpush2.msra.mxu0 0.0
  %1968 = vmatprep.mubr.f32.mxu0 0.0
  %1969 = vmatmul.mubr.f32.gmra.mxu0 %v1902
  %v1970 = vpop.f32.mrf.mxu0
  %v1971 = vadd.f32 0.0, %v1970
  %v1972 = vpop.f32.mrf.mxu0
  %1973 = vdwg.mxu0
  %v1975 = vsel %vm75, %v37, 0
  %1977 = vmatprep.subr.mxu0 0.0
  %1978 = vmatpush1.msra.mxu0 0.0
  %1979 = vmatprep.subr.mxu0 0.0
  %1980 = vmatpush1.msra.mxu0 0.0
  %1981 = vmatprep.subr.mxu0 0.0
  %1982 = vmatpush1.msra.mxu0 0.0
  %1983 = vmatprep.subr.mxu0 0.0
  %1984 = vmatpush1.msra.mxu0 0.0
  %1985 = vmatprep.subr.mxu0 0.0
  %1986 = vmatpush1.msra.mxu0 0.0
  %1987 = vmatprep.subr.mxu0 0.0
  %1988 = vmatpush1.msra.mxu0 0.0
  %1989 = vmatprep.subr.mxu0 0.0
  %1990 = vmatpush1.msra.mxu0 0.0
  %1991 = vmatprep.subr.mxu0 0.0
  %1992 = vmatpush1.msra.mxu0 0.0
  %1993 = vmatprep.subr.mxu0 0.0
  %1994 = vmatpush1.msra.mxu0 0.0
  %1995 = vmatprep.subr.mxu0 0.0
  %1996 = vmatpush1.msra.mxu0 0.0
  %1997 = vmatprep.subr.mxu0 0.0
  %1998 = vmatpush1.msra.mxu0 0.0
  %1999 = vmatprep.subr.mxu0 0.0
  %2000 = vmatpush1.msra.mxu0 0.0
  %2001 = vmatprep.subr.mxu0 0.0
  %2002 = vmatpush1.msra.mxu0 0.0
  %2003 = vmatprep.subr.mxu0 0.0
  %2004 = vmatpush1.msra.mxu0 0.0
  %2005 = vmatprep.subr.mxu0 0.0
  %2006 = vmatpush1.msra.mxu0 0.0
  %2007 = vmatprep.subr.mxu0 0.0
  %2008 = vmatpush1.msra.mxu0 %v69
  %2009 = vmatprep.subr.mxu0 0.0
  %2010 = vmatpush2.msra.mxu0 0.0
  %2011 = vmatprep.subr.mxu0 0.0
  %2012 = vmatpush2.msra.mxu0 0.0
  %2013 = vmatprep.subr.mxu0 0.0
  %2014 = vmatpush2.msra.mxu0 0.0
  %2015 = vmatprep.subr.mxu0 0.0
  %2016 = vmatpush2.msra.mxu0 0.0
  %2017 = vmatprep.subr.mxu0 0.0
  %2018 = vmatpush2.msra.mxu0 0.0
  %2019 = vmatprep.subr.mxu0 0.0
  %2020 = vmatpush2.msra.mxu0 0.0
  %2021 = vmatprep.subr.mxu0 0.0
  %2022 = vmatpush2.msra.mxu0 0.0
  %2023 = vmatprep.subr.mxu0 0.0
  %2024 = vmatpush2.msra.mxu0 0.0
  %2025 = vmatprep.subr.mxu0 0.0
  %2026 = vmatpush2.msra.mxu0 0.0
  %2027 = vmatprep.subr.mxu0 0.0
  %2028 = vmatpush2.msra.mxu0 0.0
  %2029 = vmatprep.subr.mxu0 0.0
  %2030 = vmatpush2.msra.mxu0 0.0
  %2031 = vmatprep.subr.mxu0 0.0
  %2032 = vmatpush2.msra.mxu0 0.0
  %2033 = vmatprep.subr.mxu0 0.0
  %2034 = vmatpush2.msra.mxu0 0.0
  %2035 = vmatprep.subr.mxu0 0.0
  %2036 = vmatpush2.msra.mxu0 0.0
  %2037 = vmatprep.subr.mxu0 0.0
  %2038 = vmatpush2.msra.mxu0 0.0
  %2039 = vmatprep.subr.mxu0 0.0
  %2040 = vmatpush2.msra.mxu0 0.0
  %2041 = vmatprep.mubr.f32.mxu0 0.0
  %2042 = vmatmul.mubr.f32.gmra.mxu0 %v1975
  %v2043 = vpop.f32.mrf.mxu0
  %v2044 = vadd.f32 0.0, %v2043
  %v2045 = vpop.f32.mrf.mxu0
  %2046 = vdwg.mxu0
  %v2048 = vsel %vm75, %v38, 0
  %2050 = vmatprep.subr.mxu0 0.0
  %2051 = vmatpush1.msra.mxu0 0.0
  %2052 = vmatprep.subr.mxu0 0.0
  %2053 = vmatpush1.msra.mxu0 0.0
  %2054 = vmatprep.subr.mxu0 0.0
  %2055 = vmatpush1.msra.mxu0 0.0
  %2056 = vmatprep.subr.mxu0 0.0
  %2057 = vmatpush1.msra.mxu0 0.0
  %2058 = vmatprep.subr.mxu0 0.0
  %2059 = vmatpush1.msra.mxu0 0.0
  %2060 = vmatprep.subr.mxu0 0.0
  %2061 = vmatpush1.msra.mxu0 0.0
  %2062 = vmatprep.subr.mxu0 0.0
  %2063 = vmatpush1.msra.mxu0 0.0
  %2064 = vmatprep.subr.mxu0 0.0
  %2065 = vmatpush1.msra.mxu0 0.0
  %2066 = vmatprep.subr.mxu0 0.0
  %2067 = vmatpush1.msra.mxu0 0.0
  %2068 = vmatprep.subr.mxu0 0.0
  %2069 = vmatpush1.msra.mxu0 0.0
  %2070 = vmatprep.subr.mxu0 0.0
  %2071 = vmatpush1.msra.mxu0 0.0
  %2072 = vmatprep.subr.mxu0 0.0
  %2073 = vmatpush1.msra.mxu0 0.0
  %2074 = vmatprep.subr.mxu0 0.0
  %2075 = vmatpush1.msra.mxu0 0.0
  %2076 = vmatprep.subr.mxu0 0.0
  %2077 = vmatpush1.msra.mxu0 0.0
  %2078 = vmatprep.subr.mxu0 0.0
  %2079 = vmatpush1.msra.mxu0 0.0
  %2080 = vmatprep.subr.mxu0 0.0
  %2081 = vmatpush1.msra.mxu0 %v70
  %2082 = vmatprep.subr.mxu0 0.0
  %2083 = vmatpush2.msra.mxu0 0.0
  %2084 = vmatprep.subr.mxu0 0.0
  %2085 = vmatpush2.msra.mxu0 0.0
  %2086 = vmatprep.subr.mxu0 0.0
  %2087 = vmatpush2.msra.mxu0 0.0
  %2088 = vmatprep.subr.mxu0 0.0
  %2089 = vmatpush2.msra.mxu0 0.0
  %2090 = vmatprep.subr.mxu0 0.0
  %2091 = vmatpush2.msra.mxu0 0.0
  %2092 = vmatprep.subr.mxu0 0.0
  %2093 = vmatpush2.msra.mxu0 0.0
  %2094 = vmatprep.subr.mxu0 0.0
  %2095 = vmatpush2.msra.mxu0 0.0
  %2096 = vmatprep.subr.mxu0 0.0
  %2097 = vmatpush2.msra.mxu0 0.0
  %2098 = vmatprep.subr.mxu0 0.0
  %2099 = vmatpush2.msra.mxu0 0.0
  %2100 = vmatprep.subr.mxu0 0.0
  %2101 = vmatpush2.msra.mxu0 0.0
  %2102 = vmatprep.subr.mxu0 0.0
  %2103 = vmatpush2.msra.mxu0 0.0
  %2104 = vmatprep.subr.mxu0 0.0
  %2105 = vmatpush2.msra.mxu0 0.0
  %2106 = vmatprep.subr.mxu0 0.0
  %2107 = vmatpush2.msra.mxu0 0.0
  %2108 = vmatprep.subr.mxu0 0.0
  %2109 = vmatpush2.msra.mxu0 0.0
  %2110 = vmatprep.subr.mxu0 0.0
  %2111 = vmatpush2.msra.mxu0 0.0
  %2112 = vmatprep.subr.mxu0 0.0
  %2113 = vmatpush2.msra.mxu0 0.0
  %2114 = vmatprep.mubr.f32.mxu0 0.0
  %2115 = vmatmul.mubr.f32.gmra.mxu0 %v2048
  %v2116 = vpop.f32.mrf.mxu0
  %v2117 = vadd.f32 0.0, %v2116
  %v2118 = vpop.f32.mrf.mxu0
  %2119 = vdwg.mxu0
  %v2121 = vsel %vm75, %v39, 0
  %2123 = vmatprep.subr.mxu0 0.0
  %2124 = vmatpush1.msra.mxu0 0.0
  %2125 = vmatprep.subr.mxu0 0.0
  %2126 = vmatpush1.msra.mxu0 0.0
  %2127 = vmatprep.subr.mxu0 0.0
  %2128 = vmatpush1.msra.mxu0 0.0
  %2129 = vmatprep.subr.mxu0 0.0
  %2130 = vmatpush1.msra.mxu0 0.0
  %2131 = vmatprep.subr.mxu0 0.0
  %2132 = vmatpush1.msra.mxu0 0.0
  %2133 = vmatprep.subr.mxu0 0.0
  %2134 = vmatpush1.msra.mxu0 0.0
  %2135 = vmatprep.subr.mxu0 0.0
  %2136 = vmatpush1.msra.mxu0 0.0
  %2137 = vmatprep.subr.mxu0 0.0
  %2138 = vmatpush1.msra.mxu0 0.0
  %2139 = vmatprep.subr.mxu0 0.0
  %2140 = vmatpush1.msra.mxu0 0.0
  %2141 = vmatprep.subr.mxu0 0.0
  %2142 = vmatpush1.msra.mxu0 0.0
  %2143 = vmatprep.subr.mxu0 0.0
  %2144 = vmatpush1.msra.mxu0 0.0
  %2145 = vmatprep.subr.mxu0 0.0
  %2146 = vmatpush1.msra.mxu0 0.0
  %2147 = vmatprep.subr.mxu0 0.0
  %2148 = vmatpush1.msra.mxu0 0.0
  %2149 = vmatprep.subr.mxu0 0.0
  %2150 = vmatpush1.msra.mxu0 0.0
  %2151 = vmatprep.subr.mxu0 0.0
  %2152 = vmatpush1.msra.mxu0 0.0
  %2153 = vmatprep.subr.mxu0 0.0
  %2154 = vmatpush1.msra.mxu0 %v71
  %2155 = vmatprep.subr.mxu0 0.0
  %2156 = vmatpush2.msra.mxu0 0.0
  %2157 = vmatprep.subr.mxu0 0.0
  %2158 = vmatpush2.msra.mxu0 0.0
  %2159 = vmatprep.subr.mxu0 0.0
  %2160 = vmatpush2.msra.mxu0 0.0
  %2161 = vmatprep.subr.mxu0 0.0
  %2162 = vmatpush2.msra.mxu0 0.0
  %2163 = vmatprep.subr.mxu0 0.0
  %2164 = vmatpush2.msra.mxu0 0.0
  %2165 = vmatprep.subr.mxu0 0.0
  %2166 = vmatpush2.msra.mxu0 0.0
  %2167 = vmatprep.subr.mxu0 0.0
  %2168 = vmatpush2.msra.mxu0 0.0
  %2169 = vmatprep.subr.mxu0 0.0
  %2170 = vmatpush2.msra.mxu0 0.0
  %2171 = vmatprep.subr.mxu0 0.0
  %2172 = vmatpush2.msra.mxu0 0.0
  %2173 = vmatprep.subr.mxu0 0.0
  %2174 = vmatpush2.msra.mxu0 0.0
  %2175 = vmatprep.subr.mxu0 0.0
  %2176 = vmatpush2.msra.mxu0 0.0
  %2177 = vmatprep.subr.mxu0 0.0
  %2178 = vmatpush2.msra.mxu0 0.0
  %2179 = vmatprep.subr.mxu0 0.0
  %2180 = vmatpush2.msra.mxu0 0.0
  %2181 = vmatprep.subr.mxu0 0.0
  %2182 = vmatpush2.msra.mxu0 0.0
  %2183 = vmatprep.subr.mxu0 0.0
  %2184 = vmatpush2.msra.mxu0 0.0
  %2185 = vmatprep.subr.mxu0 0.0
  %2186 = vmatpush2.msra.mxu0 0.0
  %2187 = vmatprep.mubr.f32.mxu0 0.0
  %2188 = vmatmul.mubr.f32.gmra.mxu0 %v2121
  %v2189 = vpop.f32.mrf.mxu0
  %v2190 = vadd.f32 0.0, %v2189
  %v2191 = vpop.f32.mrf.mxu0
  %2192 = vdwg.mxu0
  %v2194 = vsel %vm75, %v40, 0
  %2196 = vmatprep.subr.mxu0 0.0
  %2197 = vmatpush1.msra.mxu0 0.0
  %2198 = vmatprep.subr.mxu0 0.0
  %2199 = vmatpush1.msra.mxu0 0.0
  %2200 = vmatprep.subr.mxu0 0.0
  %2201 = vmatpush1.msra.mxu0 0.0
  %2202 = vmatprep.subr.mxu0 0.0
  %2203 = vmatpush1.msra.mxu0 0.0
  %2204 = vmatprep.subr.mxu0 0.0
  %2205 = vmatpush1.msra.mxu0 0.0
  %2206 = vmatprep.subr.mxu0 0.0
  %2207 = vmatpush1.msra.mxu0 0.0
  %2208 = vmatprep.subr.mxu0 0.0
  %2209 = vmatpush1.msra.mxu0 0.0
  %2210 = vmatprep.subr.mxu0 0.0
  %2211 = vmatpush1.msra.mxu0 0.0
  %2212 = vmatprep.subr.mxu0 0.0
  %2213 = vmatpush1.msra.mxu0 0.0
  %2214 = vmatprep.subr.mxu0 0.0
  %2215 = vmatpush1.msra.mxu0 0.0
  %2216 = vmatprep.subr.mxu0 0.0
  %2217 = vmatpush1.msra.mxu0 0.0
  %2218 = vmatprep.subr.mxu0 0.0
  %2219 = vmatpush1.msra.mxu0 0.0
  %2220 = vmatprep.subr.mxu0 0.0
  %2221 = vmatpush1.msra.mxu0 0.0
  %2222 = vmatprep.subr.mxu0 0.0
  %2223 = vmatpush1.msra.mxu0 0.0
  %2224 = vmatprep.subr.mxu0 0.0
  %2225 = vmatpush1.msra.mxu0 0.0
  %2226 = vmatprep.subr.mxu0 0.0
  %2227 = vmatpush1.msra.mxu0 %v72
  %2228 = vmatprep.subr.mxu0 0.0
  %2229 = vmatpush2.msra.mxu0 0.0
  %2230 = vmatprep.subr.mxu0 0.0
  %2231 = vmatpush2.msra.mxu0 0.0
  %2232 = vmatprep.subr.mxu0 0.0
  %2233 = vmatpush2.msra.mxu0 0.0
  %2234 = vmatprep.subr.mxu0 0.0
  %2235 = vmatpush2.msra.mxu0 0.0
  %2236 = vmatprep.subr.mxu0 0.0
  %2237 = vmatpush2.msra.mxu0 0.0
  %2238 = vmatprep.subr.mxu0 0.0
  %2239 = vmatpush2.msra.mxu0 0.0
  %2240 = vmatprep.subr.mxu0 0.0
  %2241 = vmatpush2.msra.mxu0 0.0
  %2242 = vmatprep.subr.mxu0 0.0
  %2243 = vmatpush2.msra.mxu0 0.0
  %2244 = vmatprep.subr.mxu0 0.0
  %2245 = vmatpush2.msra.mxu0 0.0
  %2246 = vmatprep.subr.mxu0 0.0
  %2247 = vmatpush2.msra.mxu0 0.0
  %2248 = vmatprep.subr.mxu0 0.0
  %2249 = vmatpush2.msra.mxu0 0.0
  %2250 = vmatprep.subr.mxu0 0.0
  %2251 = vmatpush2.msra.mxu0 0.0
  %2252 = vmatprep.subr.mxu0 0.0
  %2253 = vmatpush2.msra.mxu0 0.0
  %2254 = vmatprep.subr.mxu0 0.0
  %2255 = vmatpush2.msra.mxu0 0.0
  %2256 = vmatprep.subr.mxu0 0.0
  %2257 = vmatpush2.msra.mxu0 0.0
  %2258 = vmatprep.subr.mxu0 0.0
  %2259 = vmatpush2.msra.mxu0 0.0
  %2260 = vmatprep.mubr.f32.mxu0 0.0
  %2261 = vmatmul.mubr.f32.gmra.mxu0 %v2194
  %v2262 = vpop.f32.mrf.mxu0
  %v2263 = vadd.f32 0.0, %v2262
  %v2264 = vpop.f32.mrf.mxu0
  %2265 = vdwg.mxu0
  %v2267 = vsel %vm75, %v41, 0
  %2269 = vmatprep.subr.mxu0 0.0
  %2270 = vmatpush1.msra.mxu0 0.0
  %2271 = vmatprep.subr.mxu0 0.0
  %2272 = vmatpush1.msra.mxu0 0.0
  %2273 = vmatprep.subr.mxu0 0.0
  %2274 = vmatpush1.msra.mxu0 0.0
  %2275 = vmatprep.subr.mxu0 0.0
  %2276 = vmatpush1.msra.mxu0 0.0
  %2277 = vmatprep.subr.mxu0 0.0
  %2278 = vmatpush1.msra.mxu0 0.0
  %2279 = vmatprep.subr.mxu0 0.0
  %2280 = vmatpush1.msra.mxu0 0.0
  %2281 = vmatprep.subr.mxu0 0.0
  %2282 = vmatpush1.msra.mxu0 0.0
  %2283 = vmatprep.subr.mxu0 0.0
  %2284 = vmatpush1.msra.mxu0 0.0
  %2285 = vmatprep.subr.mxu0 0.0
  %2286 = vmatpush1.msra.mxu0 0.0
  %2287 = vmatprep.subr.mxu0 0.0
  %2288 = vmatpush1.msra.mxu0 0.0
  %2289 = vmatprep.subr.mxu0 0.0
  %2290 = vmatpush1.msra.mxu0 0.0
  %2291 = vmatprep.subr.mxu0 0.0
  %2292 = vmatpush1.msra.mxu0 0.0
  %2293 = vmatprep.subr.mxu0 0.0
  %2294 = vmatpush1.msra.mxu0 0.0
  %2295 = vmatprep.subr.mxu0 0.0
  %2296 = vmatpush1.msra.mxu0 0.0
  %2297 = vmatprep.subr.mxu0 0.0
  %2298 = vmatpush1.msra.mxu0 0.0
  %2299 = vmatprep.subr.mxu0 0.0
  %2300 = vmatpush1.msra.mxu0 %v73
  %2301 = vmatprep.subr.mxu0 0.0
  %2302 = vmatpush2.msra.mxu0 0.0
  %2303 = vmatprep.subr.mxu0 0.0
  %2304 = vmatpush2.msra.mxu0 0.0
  %2305 = vmatprep.subr.mxu0 0.0
  %2306 = vmatpush2.msra.mxu0 0.0
  %2307 = vmatprep.subr.mxu0 0.0
  %2308 = vmatpush2.msra.mxu0 0.0
  %2309 = vmatprep.subr.mxu0 0.0
  %2310 = vmatpush2.msra.mxu0 0.0
  %2311 = vmatprep.subr.mxu0 0.0
  %2312 = vmatpush2.msra.mxu0 0.0
  %2313 = vmatprep.subr.mxu0 0.0
  %2314 = vmatpush2.msra.mxu0 0.0
  %2315 = vmatprep.subr.mxu0 0.0
  %2316 = vmatpush2.msra.mxu0 0.0
  %2317 = vmatprep.subr.mxu0 0.0
  %2318 = vmatpush2.msra.mxu0 0.0
  %2319 = vmatprep.subr.mxu0 0.0
  %2320 = vmatpush2.msra.mxu0 0.0
  %2321 = vmatprep.subr.mxu0 0.0
  %2322 = vmatpush2.msra.mxu0 0.0
  %2323 = vmatprep.subr.mxu0 0.0
  %2324 = vmatpush2.msra.mxu0 0.0
  %2325 = vmatprep.subr.mxu0 0.0
  %2326 = vmatpush2.msra.mxu0 0.0
  %2327 = vmatprep.subr.mxu0 0.0
  %2328 = vmatpush2.msra.mxu0 0.0
  %2329 = vmatprep.subr.mxu0 0.0
  %2330 = vmatpush2.msra.mxu0 0.0
  %2331 = vmatprep.subr.mxu0 0.0
  %2332 = vmatpush2.msra.mxu0 0.0
  %2333 = vmatprep.mubr.f32.mxu0 0.0
  %2334 = vmatmul.mubr.f32.gmra.mxu0 %v2267
  %v2335 = vpop.f32.mrf.mxu0
  %v2336 = vadd.f32 0.0, %v2335
  %v2337 = vpop.f32.mrf.mxu0
  %2338 = vdwg.mxu0
  %v2340 = vsel %vm75, %v42, 0
  %2342 = vmatprep.subr.mxu0 0.0
  %2343 = vmatpush1.msra.mxu0 0.0
  %2344 = vmatprep.subr.mxu0 0.0
  %2345 = vmatpush1.msra.mxu0 0.0
  %2346 = vmatprep.subr.mxu0 0.0
  %2347 = vmatpush1.msra.mxu0 0.0
  %2348 = vmatprep.subr.mxu0 0.0
  %2349 = vmatpush1.msra.mxu0 0.0
  %2350 = vmatprep.subr.mxu0 0.0
  %2351 = vmatpush1.msra.mxu0 0.0
  %2352 = vmatprep.subr.mxu0 0.0
  %2353 = vmatpush1.msra.mxu0 0.0
  %2354 = vmatprep.subr.mxu0 0.0
  %2355 = vmatpush1.msra.mxu0 0.0
  %2356 = vmatprep.subr.mxu0 0.0
  %2357 = vmatpush1.msra.mxu0 0.0
  %2358 = vmatprep.subr.mxu0 0.0
  %2359 = vmatpush1.msra.mxu0 0.0
  %2360 = vmatprep.subr.mxu0 0.0
  %2361 = vmatpush1.msra.mxu0 0.0
  %2362 = vmatprep.subr.mxu0 0.0
  %2363 = vmatpush1.msra.mxu0 0.0
  %2364 = vmatprep.subr.mxu0 0.0
  %2365 = vmatpush1.msra.mxu0 0.0
  %2366 = vmatprep.subr.mxu0 0.0
  %2367 = vmatpush1.msra.mxu0 0.0
  %2368 = vmatprep.subr.mxu0 0.0
  %2369 = vmatpush1.msra.mxu0 0.0
  %2370 = vmatprep.subr.mxu0 0.0
  %2371 = vmatpush1.msra.mxu0 0.0
  %2372 = vmatprep.subr.mxu0 0.0
  %2373 = vmatpush1.msra.mxu0 %v74
  %2374 = vmatprep.subr.mxu0 0.0
  %2375 = vmatpush2.msra.mxu0 0.0
  %2376 = vmatprep.subr.mxu0 0.0
  %2377 = vmatpush2.msra.mxu0 0.0
  %2378 = vmatprep.subr.mxu0 0.0
  %2379 = vmatpush2.msra.mxu0 0.0
  %2380 = vmatprep.subr.mxu0 0.0
  %2381 = vmatpush2.msra.mxu0 0.0
  %2382 = vmatprep.subr.mxu0 0.0
  %2383 = vmatpush2.msra.mxu0 0.0
  %2384 = vmatprep.subr.mxu0 0.0
  %2385 = vmatpush2.msra.mxu0 0.0
  %2386 = vmatprep.subr.mxu0 0.0
  %2387 = vmatpush2.msra.mxu0 0.0
  %2388 = vmatprep.subr.mxu0 0.0
  %2389 = vmatpush2.msra.mxu0 0.0
  %2390 = vmatprep.subr.mxu0 0.0
  %2391 = vmatpush2.msra.mxu0 0.0
  %2392 = vmatprep.subr.mxu0 0.0
  %2393 = vmatpush2.msra.mxu0 0.0
  %2394 = vmatprep.subr.mxu0 0.0
  %2395 = vmatpush2.msra.mxu0 0.0
  %2396 = vmatprep.subr.mxu0 0.0
  %2397 = vmatpush2.msra.mxu0 0.0
  %2398 = vmatprep.subr.mxu0 0.0
  %2399 = vmatpush2.msra.mxu0 0.0
  %2400 = vmatprep.subr.mxu0 0.0
  %2401 = vmatpush2.msra.mxu0 0.0
  %2402 = vmatprep.subr.mxu0 0.0
  %2403 = vmatpush2.msra.mxu0 0.0
  %2404 = vmatprep.subr.mxu0 0.0
  %2405 = vmatpush2.msra.mxu0 0.0
  %2406 = vmatprep.mubr.f32.mxu0 0.0
  %2407 = vmatmul.mubr.f32.gmra.mxu0 %v2340
  %v2408 = vpop.f32.mrf.mxu0
  %v2409 = vadd.f32 0.0, %v2408
  %v2410 = vpop.f32.mrf.mxu0
  %2411 = vdwg.mxu0
  %vm2412 = vcmask 58368
  %2413 = vst.msk [vmem:[%s2] sm:$0x3] %vm2412, %v146
  %2414 = vst.msk [vmem:[%s2 + $0x2] sm:$0x3] %vm2412, %v219
  %2415 = vst.msk [vmem:[%s2 + $0x4] sm:$0x3] %vm2412, %v292
  %2416 = vst.msk [vmem:[%s2 + $0x6] sm:$0x3] %vm2412, %v365
  %2417 = vst.msk [vmem:[%s2 + $0x8] sm:$0x3] %vm2412, %v438
  %2418 = vst.msk [vmem:[%s2 + $0xa] sm:$0x3] %vm2412, %v511
  %2419 = vst.msk [vmem:[%s2 + $0xc] sm:$0x3] %vm2412, %v584
  %2420 = vst.msk [vmem:[%s2 + $0xe] sm:$0x3] %vm2412, %v657
  %2421 = vst.msk [vmem:[%s2 + $0x10] sm:$0x3] %vm2412, %v730
  %2422 = vst.msk [vmem:[%s2 + $0x12] sm:$0x3] %vm2412, %v803
  %2423 = vst.msk [vmem:[%s2 + $0x14] sm:$0x3] %vm2412, %v876
  %2424 = vst.msk [vmem:[%s2 + $0x16] sm:$0x3] %vm2412, %v949
  %2425 = vst.msk [vmem:[%s2 + $0x18] sm:$0x3] %vm2412, %v1022
  %2426 = vst.msk [vmem:[%s2 + $0x1a] sm:$0x3] %vm2412, %v1095
  %2427 = vst.msk [vmem:[%s2 + $0x1c] sm:$0x3] %vm2412, %v1168
  %2428 = vst.msk [vmem:[%s2 + $0x1e] sm:$0x3] %vm2412, %v1241
  %2429 = vst.msk [vmem:[%s2 + $0x20] sm:$0x3] %vm2412, %v1314
  %2430 = vst.msk [vmem:[%s2 + $0x22] sm:$0x3] %vm2412, %v1387
  %2431 = vst.msk [vmem:[%s2 + $0x24] sm:$0x3] %vm2412, %v1460
  %2432 = vst.msk [vmem:[%s2 + $0x26] sm:$0x3] %vm2412, %v1533
  %2433 = vst.msk [vmem:[%s2 + $0x28] sm:$0x3] %vm2412, %v1606
  %2434 = vst.msk [vmem:[%s2 + $0x2a] sm:$0x3] %vm2412, %v1679
  %2435 = vst.msk [vmem:[%s2 + $0x2c] sm:$0x3] %vm2412, %v1752
  %2436 = vst.msk [vmem:[%s2 + $0x2e] sm:$0x3] %vm2412, %v1825
  %2437 = vst.msk [vmem:[%s2 + $0x30] sm:$0x3] %vm2412, %v1898
  %2438 = vst.msk [vmem:[%s2 + $0x32] sm:$0x3] %vm2412, %v1971
  %2439 = vst.msk [vmem:[%s2 + $0x34] sm:$0x3] %vm2412, %v2044
  %2440 = vst.msk [vmem:[%s2 + $0x36] sm:$0x3] %vm2412, %v2117
  %2441 = vst.msk [vmem:[%s2 + $0x38] sm:$0x3] %vm2412, %v2190
  %2442 = vst.msk [vmem:[%s2 + $0x3a] sm:$0x3] %vm2412, %v2263
  %2443 = vst.msk [vmem:[%s2 + $0x3c] sm:$0x3] %vm2412, %v2336
  %2444 = vst.msk [vmem:[%s2 + $0x3e] sm:$0x3] %vm2412, %v2409
  // Predicated region
  $region10: #{tpu_custom_call.1} parent=0 // pred_check
    _
  $region11: #{tpu_custom_call.1} parent=0 // pred_check_branch
    %2446 = sbr.rel (0) target = $region13
  $region12: #{tpu_custom_call.1} parent=0 // pred_region
    _
  $region13: #{tpu_custom_call.1} parent=0 // pred_fallthru
    _
  // Predicated region
  $region14: #{tpu_custom_call.1} parent=0 // pred_check
    _
  $region15: #{tpu_custom_call.1} parent=0 // pred_check_branch
    %2448 = sbr.rel (0) target = $region17
  $region16: #{tpu_custom_call.1} parent=0 // pred_region
    _
  $region17: #{tpu_custom_call.1} parent=0 // pred_fallthru
    _

</llo_original>
